<compile_context>
chip_gen: v7x
topology: tpu7x:2x2x1
jax: 0.10.0
libtpu: 0.0.40
codegen_flags: <defaults>
</compile_context>

<pallas_src>
import functools

import jax
import jax.numpy as jnp
from jax.experimental import pallas as pl
from jax.experimental.pallas import tpu as pltpu


NOUT = 2          # fc output classes
NOUT_PAD = 128    # lane-dense padded FC output width


# ----------------------------- Pallas kernel -------------------------------


def _fused_lstm_fc_kernel(*refs, num_layers, hidden_dim, seq_len, batch):
    """Whole forward (all LSTM layers + FC) in one invocation.

    refs layout:
      inputs : x2d (T*B, E),
               [w_ih_T (in,4H), w_hh_T (H,4H), b (1,4H)] * L,
               fc_w (H,128), fc_b (1,128)
      outputs: logits_pad (B,128), h_n (L,B,H), c_n (L,B,H)
      scratch: xg (T*B,4H) input-projected gates, act (T*B,H) layer activations
    """
    n_in = 1 + 3 * num_layers + 2
    x_ref = refs[0]
    layer_refs = refs[1:1 + 3 * num_layers]
    fc_w_ref = refs[n_in - 2]
    fc_b_ref = refs[n_in - 1]
    logits_ref, hn_ref, cn_ref = refs[n_in:n_in + 3]
    xg_scr = refs[n_in + 3]
    act_scr = refs[n_in + 4]

    H = hidden_dim
    T = seq_len
    B = batch

    h_last = None
    for layer in range(num_layers):
        w_ih = layer_refs[3 * layer][...]       # (in_dim, 4H), loaded once
        w_hh = layer_refs[3 * layer + 1][...]   # (H, 4H)
        b = layer_refs[3 * layer + 2][...]      # (1, 4H), b_ih + b_hh
        is_first = layer == 0
        is_last = layer == num_layers - 1

        # Input projection for ALL timesteps: one big MXU matmul per layer,
        # bias folded in.  Source is the previous layer's activation slab
        # (VMEM resident) except for layer 0 which reads the embeddings.
        src = x_ref[...] if is_first else act_scr[...]
        xg_scr[...] = jnp.dot(src, w_ih,
                              preferred_element_type=jnp.float32) + b

        def step(t, carry):
            h, c = carry
            row = pl.ds(t * B, B)
            # Only the recurrent matmul remains inside the sequential loop.
            gates = xg_scr[row, :] + jnp.dot(
                h, w_hh, preferred_element_type=jnp.float32)      # (B, 4H)
            i_g = jax.nn.sigmoid(gates[:, 0 * H:1 * H])
            f_g = jax.nn.sigmoid(gates[:, 1 * H:2 * H])
            g_g = jnp.tanh(gates[:, 2 * H:3 * H])
            o_g = jax.nn.sigmoid(gates[:, 3 * H:4 * H])
            c_new = f_g * c + i_g * g_g
            h_new = o_g * jnp.tanh(c_new)
            if not is_last:
                act_scr[row, :] = h_new        # feed next layer; stays in VMEM
            return h_new, c_new

        zeros = jnp.zeros((B, H), jnp.float32)
        h_fin, c_fin = jax.lax.fori_loop(0, T, step, (zeros, zeros),
                                         unroll=True)
        hn_ref[layer] = h_fin                  # written once per layer
        cn_ref[layer] = c_fin
        h_last = h_fin

    # Fused FC on out[:, -1, :] == h_last; output lane-padded to 128.
    logits_ref[...] = (jnp.dot(h_last, fc_w_ref[...],
                               preferred_element_type=jnp.float32)
                       + fc_b_ref[...])


# ------------------------------ JAX wrappers -------------------------------


def prepare_fused_params(params):
    """One-time weight prep (transpose / bias-sum / pad), outside the hot path."""
    H = params["lstm"][0]["w_hh"].shape[1]
    layers = []
    for layer in params["lstm"]:
        w_ih_t = jnp.transpose(layer["w_ih"]).astype(jnp.float32)   # (in, 4H)
        w_hh_t = jnp.transpose(layer["w_hh"]).astype(jnp.float32)   # (H, 4H)
        b = (layer["b_ih"] + layer["b_hh"]).reshape(1, 4 * H).astype(jnp.float32)
        layers.append((w_ih_t, w_hh_t, b))
    fc_w_pad = jnp.zeros((H, NOUT_PAD), jnp.float32)
    fc_w_pad = fc_w_pad.at[:, :NOUT].set(jnp.transpose(params["fc_w"]))
    fc_b_pad = jnp.zeros((1, NOUT_PAD), jnp.float32).at[:, :NOUT].set(params["fc_b"])
    return {
        "embedding": params["embedding"],
        "layers": layers,
        "fc_w": fc_w_pad,
        "fc_b": fc_b_pad,
        "hidden_dim": int(H),
        "num_layers": len(params["lstm"]),
    }


def lstm_classifier_forward(fused, tokens):
    """tokens: (B, T) int32.  Returns (logits (B,2), (h_n, c_n) each (L,B,H))."""
    # Embedding lookup (plain JAX gather) -> time-major, flattened (T*B, E).
    emb = jnp.take(fused["embedding"], tokens, axis=0)          # (B, T, E)
    x = jnp.transpose(emb, (1, 0, 2)).astype(jnp.float32)       # (T, B, E)
    T, B, E = x.shape
    x2d = x.reshape(T * B, E)
    H = fused["hidden_dim"]
    L = fused["num_layers"]

    kernel = functools.partial(_fused_lstm_fc_kernel,
                               num_layers=L, hidden_dim=H, seq_len=T, batch=B)
    flat_w = [a for wb in fused["layers"] for a in wb]
    n_inputs = 1 + len(flat_w) + 2
    vmem = pltpu.MemorySpace.VMEM

    logits_pad, h_n, c_n = pl.pallas_call(
        kernel,
        out_shape=(jax.ShapeDtypeStruct((B, NOUT_PAD), jnp.float32),
                   jax.ShapeDtypeStruct((L, B, H), jnp.float32),
                   jax.ShapeDtypeStruct((L, B, H), jnp.float32)),
        in_specs=[pl.BlockSpec(memory_space=vmem)] * n_inputs,
        out_specs=(pl.BlockSpec(memory_space=vmem),
                   pl.BlockSpec(memory_space=vmem),
                   pl.BlockSpec(memory_space=vmem)),
        scratch_shapes=[pltpu.VMEM((T * B, 4 * H), jnp.float32),
                        pltpu.VMEM((T * B, H), jnp.float32)],
    )(x2d, *flat_w, fused["fc_w"], fused["fc_b"])

    return logits_pad[:, :NOUT], (h_n, c_n)


# ------------------------- deterministic parameters ------------------------


def init_params(key, vocab_size, embedding_dim, hidden_dim, num_layers):
    keys = jax.random.split(key, 3 + num_layers)
    k = 1.0 / jnp.sqrt(hidden_dim)
    params = {
        "embedding": jax.random.normal(
            keys[0], (vocab_size, embedding_dim), jnp.float32),
        "fc_w": jax.random.uniform(
            keys[1], (NOUT, hidden_dim), jnp.float32, -k, k),
        "fc_b": jax.random.uniform(keys[2], (NOUT,), jnp.float32, -k, k),
        "lstm": [],
    }
    for layer in range(num_layers):
        in_dim = embedding_dim if layer == 0 else hidden_dim
        lk = jax.random.split(keys[3 + layer], 4)
        params["lstm"].append({
            "w_ih": jax.random.uniform(
                lk[0], (4 * hidden_dim, in_dim), jnp.float32, -k, k),
            "w_hh": jax.random.uniform(
                lk[1], (4 * hidden_dim, hidden_dim), jnp.float32, -k, k),
            "b_ih": jax.random.uniform(
                lk[2], (4 * hidden_dim,), jnp.float32, -k, k),
            "b_hh": jax.random.uniform(
                lk[3], (4 * hidden_dim,), jnp.float32, -k, k),
        })
    return params


# ------------------------------ pure-JAX ref --------------------------------


def _ref_forward(params, tokens):
    emb = jnp.take(params["embedding"], tokens, axis=0)
    x = jnp.transpose(emb, (1, 0, 2)).astype(jnp.float32)   # (T, B, E)
    T, B, _ = x.shape
    H = params["lstm"][0]["w_hh"].shape[1]
    for layer in params["lstm"]:
        def step(carry, x_t):
            h, c = carry
            gates = (x_t @ layer["w_ih"].T + layer["b_ih"]
                     + h @ layer["w_hh"].T + layer["b_hh"])
            i, f, g, o = jnp.split(gates, 4, axis=-1)
            c = jax.nn.sigmoid(f) * c + jax.nn.sigmoid(i) * jnp.tanh(g)
            h = jax.nn.sigmoid(o) * jnp.tanh(c)
            return (h, c), h
        init = (jnp.zeros((B, H), jnp.float32), jnp.zeros((B, H), jnp.float32))
        _, x = jax.lax.scan(step, init, x)
    return x[-1] @ params["fc_w"].T + params["fc_b"]


# ---------------------------------- main ------------------------------------


if __name__ == "__main__":
    vocab_size, embedding_dim, hidden_dim, num_layers = 50, 16, 32, 2
    batch, seq_len = 2, 8

    key = jax.random.PRNGKey(0)
    pkey, tkey = jax.random.split(key)
    params = init_params(pkey, vocab_size, embedding_dim, hidden_dim, num_layers)
    tokens = jax.random.randint(tkey, (batch, seq_len), 0, vocab_size, jnp.int32)

    fused = prepare_fused_params(params)          # one-time weight prep
    forward = jax.jit(lambda toks: lstm_classifier_forward(fused, toks))

    logits, (h_n, c_n) = forward(tokens)
    jax.block_until_ready((logits, h_n, c_n))

    assert logits.shape == (batch, NOUT)
    assert h_n.shape == (num_layers, batch, hidden_dim)
    assert c_n.shape == (num_layers, batch, hidden_dim)

    # Loose sanity check vs. pure-JAX reference (MXU precision differences).
    ref = _ref_forward(params, tokens)
    assert jnp.allclose(logits, ref, atol=2e-2, rtol=2e-2)

    print("KERNEL_OK")
</pallas_src>

<mosaic_0001>
module attributes {stable_mosaic.version = 11 : i64} {
  func.func @_fused_lstm_fc_kernel(%arg0: memref<16x16xf32, #tpu.memory_space<vmem>>, %arg1: memref<16x128xf32, #tpu.memory_space<vmem>>, %arg2: memref<32x128xf32, #tpu.memory_space<vmem>>, %arg3: memref<1x128xf32, #tpu.memory_space<vmem>>, %arg4: memref<32x128xf32, #tpu.memory_space<vmem>>, %arg5: memref<32x128xf32, #tpu.memory_space<vmem>>, %arg6: memref<1x128xf32, #tpu.memory_space<vmem>>, %arg7: memref<32x128xf32, #tpu.memory_space<vmem>>, %arg8: memref<1x128xf32, #tpu.memory_space<vmem>>, %arg9: memref<2x128xf32, #tpu.memory_space<vmem>>, %arg10: memref<2x2x32xf32, #tpu.memory_space<vmem>>, %arg11: memref<2x2x32xf32, #tpu.memory_space<vmem>>, %arg12: memref<16x128xf32, #tpu.memory_space<vmem>>, %arg13: memref<16x32xf32, #tpu.memory_space<vmem>>) attributes {dimension_semantics = [], scalar_prefetch = 0 : i64, scratch_operands = 2 : i64, tpu.core_type = #tpu.core_type<tc>} {
    %c0 = arith.constant 0 : index
    %c0_0 = arith.constant 0 : index
    %0 = vector.load %arg1[%c0, %c0_0] : memref<16x128xf32, #tpu.memory_space<vmem>>, vector<16x128xf32>
    %c0_1 = arith.constant 0 : index
    %c0_2 = arith.constant 0 : index
    %1 = vector.load %arg2[%c0_1, %c0_2] : memref<32x128xf32, #tpu.memory_space<vmem>>, vector<32x128xf32>
    %c0_3 = arith.constant 0 : index
    %c0_4 = arith.constant 0 : index
    %2 = vector.load %arg3[%c0_3, %c0_4] : memref<1x128xf32, #tpu.memory_space<vmem>>, vector<1x128xf32>
    %c0_5 = arith.constant 0 : index
    %c0_6 = arith.constant 0 : index
    %3 = vector.load %arg0[%c0_5, %c0_6] : memref<16x16xf32, #tpu.memory_space<vmem>>, vector<16x16xf32>
    %cst = arith.constant dense<0.000000e+00> : vector<16x128xf32>
    %4 = tpu.matmul %3, %0, %cst {dimension_numbers = #tpu.dot_dimension_numbers<[1], [0], [0], [1], [0, 0, 1, 1], [], []>} : vector<16x16xf32>, vector<16x128xf32>, vector<16x128xf32> -> vector<16x128xf32>
    %5 = vector.broadcast %2 : vector<1x128xf32> to vector<16x128xf32>
    %6 = arith.addf %4, %5 : vector<16x128xf32>
    %c0_7 = arith.constant 0 : index
    %c0_8 = arith.constant 0 : index
    %7 = vector.load %arg12[%c0_7, %c0_8] : memref<16x128xf32, #tpu.memory_space<vmem>>, vector<16x128xf32>
    tpu.vector_store %arg12[%c0_7, %c0_8], %6 {strides = array<i32>} : memref<16x128xf32, #tpu.memory_space<vmem>>, vector<16x128xf32>,
    %cst_9 = arith.constant 0.000000e+00 : f32
    %8 = vector.broadcast %cst_9 : f32 to vector<2x32xf32>
    %c0_i32 = arith.constant 0 : i32
    %c2_i32 = arith.constant 2 : i32
    %9 = arith.muli %c0_i32, %c2_i32 : i32
    %10 = arith.index_cast %9 : i32 to index
    %c0_10 = arith.constant 0 : index
    %11 = vector.load %arg12[%10, %c0_10] : memref<16x128xf32, #tpu.memory_space<vmem>>, vector<2x128xf32>
    %cst_11 = arith.constant dense<0.000000e+00> : vector<2x128xf32>
    %12 = tpu.matmul %8, %1, %cst_11 {dimension_numbers = #tpu.dot_dimension_numbers<[1], [0], [0], [1], [0, 0, 1, 1], [], []>} : vector<2x32xf32>, vector<32x128xf32>, vector<2x128xf32> -> vector<2x128xf32>
    %13 = arith.addf %11, %12 : vector<2x128xf32>
    %14 = vector.extract_strided_slice %13 {offsets = [0, 0], sizes = [2, 32], strides = [1, 1]} : vector<2x128xf32> to vector<2x32xf32>
    %15 = arith.negf %14 : vector<2x32xf32>
    %16 = math.exp %15 : vector<2x32xf32>
    %cst_12 = arith.constant 1.000000e+00 : f32
    %17 = vector.broadcast %cst_12 : f32 to vector<2x32xf32>
    %18 = arith.addf %17, %16 : vector<2x32xf32>
    %19 = arith.divf %17, %18 : vector<2x32xf32>
    %20 = vector.extract_strided_slice %13 {offsets = [0, 32], sizes = [2, 32], strides = [1, 1]} : vector<2x128xf32> to vector<2x32xf32>
    %21 = arith.negf %20 : vector<2x32xf32>
    %22 = math.exp %21 : vector<2x32xf32>
    %cst_13 = arith.constant 1.000000e+00 : f32
    %23 = vector.broadcast %cst_13 : f32 to vector<2x32xf32>
    %24 = arith.addf %23, %22 : vector<2x32xf32>
    %25 = arith.divf %23, %24 : vector<2x32xf32>
    %26 = vector.extract_strided_slice %13 {offsets = [0, 64], sizes = [2, 32], strides = [1, 1]} : vector<2x128xf32> to vector<2x32xf32>
    %27 = math.tanh %26 : vector<2x32xf32>
    %28 = vector.extract_strided_slice %13 {offsets = [0, 96], sizes = [2, 32], strides = [1, 1]} : vector<2x128xf32> to vector<2x32xf32>
    %29 = arith.negf %28 : vector<2x32xf32>
    %30 = math.exp %29 : vector<2x32xf32>
    %cst_14 = arith.constant 1.000000e+00 : f32
    %31 = vector.broadcast %cst_14 : f32 to vector<2x32xf32>
    %32 = arith.addf %31, %30 : vector<2x32xf32>
    %33 = arith.divf %31, %32 : vector<2x32xf32>
    %34 = arith.mulf %25, %8 : vector<2x32xf32>
    %35 = arith.mulf %19, %27 : vector<2x32xf32>
    %36 = arith.addf %34, %35 : vector<2x32xf32>
    %37 = math.tanh %36 : vector<2x32xf32>
    %38 = arith.mulf %33, %37 : vector<2x32xf32>
    %39 = arith.index_cast %9 : i32 to index
    %c0_15 = arith.constant 0 : index
    %40 = vector.load %arg13[%39, %c0_15] : memref<16x32xf32, #tpu.memory_space<vmem>>, vector<2x32xf32>
    tpu.vector_store %arg13[%39, %c0_15], %38 {strides = array<i32>} : memref<16x32xf32, #tpu.memory_space<vmem>>, vector<2x32xf32>,
    %c1_i32 = arith.constant 1 : i32
    %c2_i32_16 = arith.constant 2 : i32
    %41 = arith.muli %c1_i32, %c2_i32_16 : i32
    %42 = arith.index_cast %41 : i32 to index
    %c0_17 = arith.constant 0 : index
    %43 = vector.load %arg12[%42, %c0_17] : memref<16x128xf32, #tpu.memory_space<vmem>>, vector<2x128xf32>
    %cst_18 = arith.constant dense<0.000000e+00> : vector<2x128xf32>
    %44 = tpu.matmul %38, %1, %cst_18 {dimension_numbers = #tpu.dot_dimension_numbers<[1], [0], [0], [1], [0, 0, 1, 1], [], []>} : vector<2x32xf32>, vector<32x128xf32>, vector<2x128xf32> -> vector<2x128xf32>
    %45 = arith.addf %43, %44 : vector<2x128xf32>
    %46 = vector.extract_strided_slice %45 {offsets = [0, 0], sizes = [2, 32], strides = [1, 1]} : vector<2x128xf32> to vector<2x32xf32>
    %47 = arith.negf %46 : vector<2x32xf32>
    %48 = math.exp %47 : vector<2x32xf32>
    %cst_19 = arith.constant 1.000000e+00 : f32
    %49 = vector.broadcast %cst_19 : f32 to vector<2x32xf32>
    %50 = arith.addf %49, %48 : vector<2x32xf32>
    %51 = arith.divf %49, %50 : vector<2x32xf32>
    %52 = vector.extract_strided_slice %45 {offsets = [0, 32], sizes = [2, 32], strides = [1, 1]} : vector<2x128xf32> to vector<2x32xf32>
    %53 = arith.negf %52 : vector<2x32xf32>
    %54 = math.exp %53 : vector<2x32xf32>
    %cst_20 = arith.constant 1.000000e+00 : f32
    %55 = vector.broadcast %cst_20 : f32 to vector<2x32xf32>
    %56 = arith.addf %55, %54 : vector<2x32xf32>
    %57 = arith.divf %55, %56 : vector<2x32xf32>
    %58 = vector.extract_strided_slice %45 {offsets = [0, 64], sizes = [2, 32], strides = [1, 1]} : vector<2x128xf32> to vector<2x32xf32>
    %59 = math.tanh %58 : vector<2x32xf32>
    %60 = vector.extract_strided_slice %45 {offsets = [0, 96], sizes = [2, 32], strides = [1, 1]} : vector<2x128xf32> to vector<2x32xf32>
    %61 = arith.negf %60 : vector<2x32xf32>
    %62 = math.exp %61 : vector<2x32xf32>
    %cst_21 = arith.constant 1.000000e+00 : f32
    %63 = vector.broadcast %cst_21 : f32 to vector<2x32xf32>
    %64 = arith.addf %63, %62 : vector<2x32xf32>
    %65 = arith.divf %63, %64 : vector<2x32xf32>
    %66 = arith.mulf %57, %36 : vector<2x32xf32>
    %67 = arith.mulf %51, %59 : vector<2x32xf32>
    %68 = arith.addf %66, %67 : vector<2x32xf32>
    %69 = math.tanh %68 : vector<2x32xf32>
    %70 = arith.mulf %65, %69 : vector<2x32xf32>
    %71 = arith.index_cast %41 : i32 to index
    %c0_22 = arith.constant 0 : index
    %72 = vector.load %arg13[%71, %c0_22] : memref<16x32xf32, #tpu.memory_space<vmem>>, vector<2x32xf32>
    tpu.vector_store %arg13[%71, %c0_22], %70 {strides = array<i32>} : memref<16x32xf32, #tpu.memory_space<vmem>>, vector<2x32xf32>,
    %c2_i32_23 = arith.constant 2 : i32
    %c2_i32_24 = arith.constant 2 : i32
    %73 = arith.muli %c2_i32_23, %c2_i32_24 : i32
    %74 = arith.index_cast %73 : i32 to index
    %c0_25 = arith.constant 0 : index
    %75 = vector.load %arg12[%74, %c0_25] : memref<16x128xf32, #tpu.memory_space<vmem>>, vector<2x128xf32>
    %cst_26 = arith.constant dense<0.000000e+00> : vector<2x128xf32>
    %76 = tpu.matmul %70, %1, %cst_26 {dimension_numbers = #tpu.dot_dimension_numbers<[1], [0], [0], [1], [0, 0, 1, 1], [], []>} : vector<2x32xf32>, vector<32x128xf32>, vector<2x128xf32> -> vector<2x128xf32>
    %77 = arith.addf %75, %76 : vector<2x128xf32>
    %78 = vector.extract_strided_slice %77 {offsets = [0, 0], sizes = [2, 32], strides = [1, 1]} : vector<2x128xf32> to vector<2x32xf32>
    %79 = arith.negf %78 : vector<2x32xf32>
    %80 = math.exp %79 : vector<2x32xf32>
    %cst_27 = arith.constant 1.000000e+00 : f32
    %81 = vector.broadcast %cst_27 : f32 to vector<2x32xf32>
    %82 = arith.addf %81, %80 : vector<2x32xf32>
    %83 = arith.divf %81, %82 : vector<2x32xf32>
    %84 = vector.extract_strided_slice %77 {offsets = [0, 32], sizes = [2, 32], strides = [1, 1]} : vector<2x128xf32> to vector<2x32xf32>
    %85 = arith.negf %84 : vector<2x32xf32>
    %86 = math.exp %85 : vector<2x32xf32>
    %cst_28 = arith.constant 1.000000e+00 : f32
    %87 = vector.broadcast %cst_28 : f32 to vector<2x32xf32>
    %88 = arith.addf %87, %86 : vector<2x32xf32>
    %89 = arith.divf %87, %88 : vector<2x32xf32>
    %90 = vector.extract_strided_slice %77 {offsets = [0, 64], sizes = [2, 32], strides = [1, 1]} : vector<2x128xf32> to vector<2x32xf32>
    %91 = math.tanh %90 : vector<2x32xf32>
    %92 = vector.extract_strided_slice %77 {offsets = [0, 96], sizes = [2, 32], strides = [1, 1]} : vector<2x128xf32> to vector<2x32xf32>
    %93 = arith.negf %92 : vector<2x32xf32>
    %94 = math.exp %93 : vector<2x32xf32>
    %cst_29 = arith.constant 1.000000e+00 : f32
    %95 = vector.broadcast %cst_29 : f32 to vector<2x32xf32>
    %96 = arith.addf %95, %94 : vector<2x32xf32>
    %97 = arith.divf %95, %96 : vector<2x32xf32>
    %98 = arith.mulf %89, %68 : vector<2x32xf32>
    %99 = arith.mulf %83, %91 : vector<2x32xf32>
    %100 = arith.addf %98, %99 : vector<2x32xf32>
    %101 = math.tanh %100 : vector<2x32xf32>
    %102 = arith.mulf %97, %101 : vector<2x32xf32>
    %103 = arith.index_cast %73 : i32 to index
    %c0_30 = arith.constant 0 : index
    %104 = vector.load %arg13[%103, %c0_30] : memref<16x32xf32, #tpu.memory_space<vmem>>, vector<2x32xf32>
    tpu.vector_store %arg13[%103, %c0_30], %102 {strides = array<i32>} : memref<16x32xf32, #tpu.memory_space<vmem>>, vector<2x32xf32>,
    %c3_i32 = arith.constant 3 : i32
    %c2_i32_31 = arith.constant 2 : i32
    %105 = arith.muli %c3_i32, %c2_i32_31 : i32
    %106 = arith.index_cast %105 : i32 to index
    %c0_32 = arith.constant 0 : index
    %107 = vector.load %arg12[%106, %c0_32] : memref<16x128xf32, #tpu.memory_space<vmem>>, vector<2x128xf32>
    %cst_33 = arith.constant dense<0.000000e+00> : vector<2x128xf32>
    %108 = tpu.matmul %102, %1, %cst_33 {dimension_numbers = #tpu.dot_dimension_numbers<[1], [0], [0], [1], [0, 0, 1, 1], [], []>} : vector<2x32xf32>, vector<32x128xf32>, vector<2x128xf32> -> vector<2x128xf32>
    %109 = arith.addf %107, %108 : vector<2x128xf32>
    %110 = vector.extract_strided_slice %109 {offsets = [0, 0], sizes = [2, 32], strides = [1, 1]} : vector<2x128xf32> to vector<2x32xf32>
    %111 = arith.negf %110 : vector<2x32xf32>
    %112 = math.exp %111 : vector<2x32xf32>
    %cst_34 = arith.constant 1.000000e+00 : f32
    %113 = vector.broadcast %cst_34 : f32 to vector<2x32xf32>
    %114 = arith.addf %113, %112 : vector<2x32xf32>
    %115 = arith.divf %113, %114 : vector<2x32xf32>
    %116 = vector.extract_strided_slice %109 {offsets = [0, 32], sizes = [2, 32], strides = [1, 1]} : vector<2x128xf32> to vector<2x32xf32>
    %117 = arith.negf %116 : vector<2x32xf32>
    %118 = math.exp %117 : vector<2x32xf32>
    %cst_35 = arith.constant 1.000000e+00 : f32
    %119 = vector.broadcast %cst_35 : f32 to vector<2x32xf32>
    %120 = arith.addf %119, %118 : vector<2x32xf32>
    %121 = arith.divf %119, %120 : vector<2x32xf32>
    %122 = vector.extract_strided_slice %109 {offsets = [0, 64], sizes = [2, 32], strides = [1, 1]} : vector<2x128xf32> to vector<2x32xf32>
    %123 = math.tanh %122 : vector<2x32xf32>
    %124 = vector.extract_strided_slice %109 {offsets = [0, 96], sizes = [2, 32], strides = [1, 1]} : vector<2x128xf32> to vector<2x32xf32>
    %125 = arith.negf %124 : vector<2x32xf32>
    %126 = math.exp %125 : vector<2x32xf32>
    %cst_36 = arith.constant 1.000000e+00 : f32
    %127 = vector.broadcast %cst_36 : f32 to vector<2x32xf32>
    %128 = arith.addf %127, %126 : vector<2x32xf32>
    %129 = arith.divf %127, %128 : vector<2x32xf32>
    %130 = arith.mulf %121, %100 : vector<2x32xf32>
    %131 = arith.mulf %115, %123 : vector<2x32xf32>
    %132 = arith.addf %130, %131 : vector<2x32xf32>
    %133 = math.tanh %132 : vector<2x32xf32>
    %134 = arith.mulf %129, %133 : vector<2x32xf32>
    %135 = arith.index_cast %105 : i32 to index
    %c0_37 = arith.constant 0 : index
    %136 = vector.load %arg13[%135, %c0_37] : memref<16x32xf32, #tpu.memory_space<vmem>>, vector<2x32xf32>
    tpu.vector_store %arg13[%135, %c0_37], %134 {strides = array<i32>} : memref<16x32xf32, #tpu.memory_space<vmem>>, vector<2x32xf32>,
    %c4_i32 = arith.constant 4 : i32
    %c2_i32_38 = arith.constant 2 : i32
    %137 = arith.muli %c4_i32, %c2_i32_38 : i32
    %138 = arith.index_cast %137 : i32 to index
    %c0_39 = arith.constant 0 : index
    %139 = vector.load %arg12[%138, %c0_39] : memref<16x128xf32, #tpu.memory_space<vmem>>, vector<2x128xf32>
    %cst_40 = arith.constant dense<0.000000e+00> : vector<2x128xf32>
    %140 = tpu.matmul %134, %1, %cst_40 {dimension_numbers = #tpu.dot_dimension_numbers<[1], [0], [0], [1], [0, 0, 1, 1], [], []>} : vector<2x32xf32>, vector<32x128xf32>, vector<2x128xf32> -> vector<2x128xf32>
    %141 = arith.addf %139, %140 : vector<2x128xf32>
    %142 = vector.extract_strided_slice %141 {offsets = [0, 0], sizes = [2, 32], strides = [1, 1]} : vector<2x128xf32> to vector<2x32xf32>
    %143 = arith.negf %142 : vector<2x32xf32>
    %144 = math.exp %143 : vector<2x32xf32>
    %cst_41 = arith.constant 1.000000e+00 : f32
    %145 = vector.broadcast %cst_41 : f32 to vector<2x32xf32>
    %146 = arith.addf %145, %144 : vector<2x32xf32>
    %147 = arith.divf %145, %146 : vector<2x32xf32>
    %148 = vector.extract_strided_slice %141 {offsets = [0, 32], sizes = [2, 32], strides = [1, 1]} : vector<2x128xf32> to vector<2x32xf32>
    %149 = arith.negf %148 : vector<2x32xf32>
    %150 = math.exp %149 : vector<2x32xf32>
    %cst_42 = arith.constant 1.000000e+00 : f32
    %151 = vector.broadcast %cst_42 : f32 to vector<2x32xf32>
    %152 = arith.addf %151, %150 : vector<2x32xf32>
    %153 = arith.divf %151, %152 : vector<2x32xf32>
    %154 = vector.extract_strided_slice %141 {offsets = [0, 64], sizes = [2, 32], strides = [1, 1]} : vector<2x128xf32> to vector<2x32xf32>
    %155 = math.tanh %154 : vector<2x32xf32>
    %156 = vector.extract_strided_slice %141 {offsets = [0, 96], sizes = [2, 32], strides = [1, 1]} : vector<2x128xf32> to vector<2x32xf32>
    %157 = arith.negf %156 : vector<2x32xf32>
    %158 = math.exp %157 : vector<2x32xf32>
    %cst_43 = arith.constant 1.000000e+00 : f32
    %159 = vector.broadcast %cst_43 : f32 to vector<2x32xf32>
    %160 = arith.addf %159, %158 : vector<2x32xf32>
    %161 = arith.divf %159, %160 : vector<2x32xf32>
    %162 = arith.mulf %153, %132 : vector<2x32xf32>
    %163 = arith.mulf %147, %155 : vector<2x32xf32>
    %164 = arith.addf %162, %163 : vector<2x32xf32>
    %165 = math.tanh %164 : vector<2x32xf32>
    %166 = arith.mulf %161, %165 : vector<2x32xf32>
    %167 = arith.index_cast %137 : i32 to index
    %c0_44 = arith.constant 0 : index
    %168 = vector.load %arg13[%167, %c0_44] : memref<16x32xf32, #tpu.memory_space<vmem>>, vector<2x32xf32>
    tpu.vector_store %arg13[%167, %c0_44], %166 {strides = array<i32>} : memref<16x32xf32, #tpu.memory_space<vmem>>, vector<2x32xf32>,
    %c5_i32 = arith.constant 5 : i32
    %c2_i32_45 = arith.constant 2 : i32
    %169 = arith.muli %c5_i32, %c2_i32_45 : i32
    %170 = arith.index_cast %169 : i32 to index
    %c0_46 = arith.constant 0 : index
    %171 = vector.load %arg12[%170, %c0_46] : memref<16x128xf32, #tpu.memory_space<vmem>>, vector<2x128xf32>
    %cst_47 = arith.constant dense<0.000000e+00> : vector<2x128xf32>
    %172 = tpu.matmul %166, %1, %cst_47 {dimension_numbers = #tpu.dot_dimension_numbers<[1], [0], [0], [1], [0, 0, 1, 1], [], []>} : vector<2x32xf32>, vector<32x128xf32>, vector<2x128xf32> -> vector<2x128xf32>
    %173 = arith.addf %171, %172 : vector<2x128xf32>
    %174 = vector.extract_strided_slice %173 {offsets = [0, 0], sizes = [2, 32], strides = [1, 1]} : vector<2x128xf32> to vector<2x32xf32>
    %175 = arith.negf %174 : vector<2x32xf32>
    %176 = math.exp %175 : vector<2x32xf32>
    %cst_48 = arith.constant 1.000000e+00 : f32
    %177 = vector.broadcast %cst_48 : f32 to vector<2x32xf32>
    %178 = arith.addf %177, %176 : vector<2x32xf32>
    %179 = arith.divf %177, %178 : vector<2x32xf32>
    %180 = vector.extract_strided_slice %173 {offsets = [0, 32], sizes = [2, 32], strides = [1, 1]} : vector<2x128xf32> to vector<2x32xf32>
    %181 = arith.negf %180 : vector<2x32xf32>
    %182 = math.exp %181 : vector<2x32xf32>
    %cst_49 = arith.constant 1.000000e+00 : f32
    %183 = vector.broadcast %cst_49 : f32 to vector<2x32xf32>
    %184 = arith.addf %183, %182 : vector<2x32xf32>
    %185 = arith.divf %183, %184 : vector<2x32xf32>
    %186 = vector.extract_strided_slice %173 {offsets = [0, 64], sizes = [2, 32], strides = [1, 1]} : vector<2x128xf32> to vector<2x32xf32>
    %187 = math.tanh %186 : vector<2x32xf32>
    %188 = vector.extract_strided_slice %173 {offsets = [0, 96], sizes = [2, 32], strides = [1, 1]} : vector<2x128xf32> to vector<2x32xf32>
    %189 = arith.negf %188 : vector<2x32xf32>
    %190 = math.exp %189 : vector<2x32xf32>
    %cst_50 = arith.constant 1.000000e+00 : f32
    %191 = vector.broadcast %cst_50 : f32 to vector<2x32xf32>
    %192 = arith.addf %191, %190 : vector<2x32xf32>
    %193 = arith.divf %191, %192 : vector<2x32xf32>
    %194 = arith.mulf %185, %164 : vector<2x32xf32>
    %195 = arith.mulf %179, %187 : vector<2x32xf32>
    %196 = arith.addf %194, %195 : vector<2x32xf32>
    %197 = math.tanh %196 : vector<2x32xf32>
    %198 = arith.mulf %193, %197 : vector<2x32xf32>
    %199 = arith.index_cast %169 : i32 to index
    %c0_51 = arith.constant 0 : index
    %200 = vector.load %arg13[%199, %c0_51] : memref<16x32xf32, #tpu.memory_space<vmem>>, vector<2x32xf32>
    tpu.vector_store %arg13[%199, %c0_51], %198 {strides = array<i32>} : memref<16x32xf32, #tpu.memory_space<vmem>>, vector<2x32xf32>,
    %c6_i32 = arith.constant 6 : i32
    %c2_i32_52 = arith.constant 2 : i32
    %201 = arith.muli %c6_i32, %c2_i32_52 : i32
    %202 = arith.index_cast %201 : i32 to index
    %c0_53 = arith.constant 0 : index
    %203 = vector.load %arg12[%202, %c0_53] : memref<16x128xf32, #tpu.memory_space<vmem>>, vector<2x128xf32>
    %cst_54 = arith.constant dense<0.000000e+00> : vector<2x128xf32>
    %204 = tpu.matmul %198, %1, %cst_54 {dimension_numbers = #tpu.dot_dimension_numbers<[1], [0], [0], [1], [0, 0, 1, 1], [], []>} : vector<2x32xf32>, vector<32x128xf32>, vector<2x128xf32> -> vector<2x128xf32>
    %205 = arith.addf %203, %204 : vector<2x128xf32>
    %206 = vector.extract_strided_slice %205 {offsets = [0, 0], sizes = [2, 32], strides = [1, 1]} : vector<2x128xf32> to vector<2x32xf32>
    %207 = arith.negf %206 : vector<2x32xf32>
    %208 = math.exp %207 : vector<2x32xf32>
    %cst_55 = arith.constant 1.000000e+00 : f32
    %209 = vector.broadcast %cst_55 : f32 to vector<2x32xf32>
    %210 = arith.addf %209, %208 : vector<2x32xf32>
    %211 = arith.divf %209, %210 : vector<2x32xf32>
    %212 = vector.extract_strided_slice %205 {offsets = [0, 32], sizes = [2, 32], strides = [1, 1]} : vector<2x128xf32> to vector<2x32xf32>
    %213 = arith.negf %212 : vector<2x32xf32>
    %214 = math.exp %213 : vector<2x32xf32>
    %cst_56 = arith.constant 1.000000e+00 : f32
    %215 = vector.broadcast %cst_56 : f32 to vector<2x32xf32>
    %216 = arith.addf %215, %214 : vector<2x32xf32>
    %217 = arith.divf %215, %216 : vector<2x32xf32>
    %218 = vector.extract_strided_slice %205 {offsets = [0, 64], sizes = [2, 32], strides = [1, 1]} : vector<2x128xf32> to vector<2x32xf32>
    %219 = math.tanh %218 : vector<2x32xf32>
    %220 = vector.extract_strided_slice %205 {offsets = [0, 96], sizes = [2, 32], strides = [1, 1]} : vector<2x128xf32> to vector<2x32xf32>
    %221 = arith.negf %220 : vector<2x32xf32>
    %222 = math.exp %221 : vector<2x32xf32>
    %cst_57 = arith.constant 1.000000e+00 : f32
    %223 = vector.broadcast %cst_57 : f32 to vector<2x32xf32>
    %224 = arith.addf %223, %222 : vector<2x32xf32>
    %225 = arith.divf %223, %224 : vector<2x32xf32>
    %226 = arith.mulf %217, %196 : vector<2x32xf32>
    %227 = arith.mulf %211, %219 : vector<2x32xf32>
    %228 = arith.addf %226, %227 : vector<2x32xf32>
    %229 = math.tanh %228 : vector<2x32xf32>
    %230 = arith.mulf %225, %229 : vector<2x32xf32>
    %231 = arith.index_cast %201 : i32 to index
    %c0_58 = arith.constant 0 : index
    %232 = vector.load %arg13[%231, %c0_58] : memref<16x32xf32, #tpu.memory_space<vmem>>, vector<2x32xf32>
    tpu.vector_store %arg13[%231, %c0_58], %230 {strides = array<i32>} : memref<16x32xf32, #tpu.memory_space<vmem>>, vector<2x32xf32>,
    %c7_i32 = arith.constant 7 : i32
    %c2_i32_59 = arith.constant 2 : i32
    %233 = arith.muli %c7_i32, %c2_i32_59 : i32
    %234 = arith.index_cast %233 : i32 to index
    %c0_60 = arith.constant 0 : index
    %235 = vector.load %arg12[%234, %c0_60] : memref<16x128xf32, #tpu.memory_space<vmem>>, vector<2x128xf32>
    %cst_61 = arith.constant dense<0.000000e+00> : vector<2x128xf32>
    %236 = tpu.matmul %230, %1, %cst_61 {dimension_numbers = #tpu.dot_dimension_numbers<[1], [0], [0], [1], [0, 0, 1, 1], [], []>} : vector<2x32xf32>, vector<32x128xf32>, vector<2x128xf32> -> vector<2x128xf32>
    %237 = arith.addf %235, %236 : vector<2x128xf32>
    %238 = vector.extract_strided_slice %237 {offsets = [0, 0], sizes = [2, 32], strides = [1, 1]} : vector<2x128xf32> to vector<2x32xf32>
    %239 = arith.negf %238 : vector<2x32xf32>
    %240 = math.exp %239 : vector<2x32xf32>
    %cst_62 = arith.constant 1.000000e+00 : f32
    %241 = vector.broadcast %cst_62 : f32 to vector<2x32xf32>
    %242 = arith.addf %241, %240 : vector<2x32xf32>
    %243 = arith.divf %241, %242 : vector<2x32xf32>
    %244 = vector.extract_strided_slice %237 {offsets = [0, 32], sizes = [2, 32], strides = [1, 1]} : vector<2x128xf32> to vector<2x32xf32>
    %245 = arith.negf %244 : vector<2x32xf32>
    %246 = math.exp %245 : vector<2x32xf32>
    %cst_63 = arith.constant 1.000000e+00 : f32
    %247 = vector.broadcast %cst_63 : f32 to vector<2x32xf32>
    %248 = arith.addf %247, %246 : vector<2x32xf32>
    %249 = arith.divf %247, %248 : vector<2x32xf32>
    %250 = vector.extract_strided_slice %237 {offsets = [0, 64], sizes = [2, 32], strides = [1, 1]} : vector<2x128xf32> to vector<2x32xf32>
    %251 = math.tanh %250 : vector<2x32xf32>
    %252 = vector.extract_strided_slice %237 {offsets = [0, 96], sizes = [2, 32], strides = [1, 1]} : vector<2x128xf32> to vector<2x32xf32>
    %253 = arith.negf %252 : vector<2x32xf32>
    %254 = math.exp %253 : vector<2x32xf32>
    %cst_64 = arith.constant 1.000000e+00 : f32
    %255 = vector.broadcast %cst_64 : f32 to vector<2x32xf32>
    %256 = arith.addf %255, %254 : vector<2x32xf32>
    %257 = arith.divf %255, %256 : vector<2x32xf32>
    %258 = arith.mulf %249, %228 : vector<2x32xf32>
    %259 = arith.mulf %243, %251 : vector<2x32xf32>
    %260 = arith.addf %258, %259 : vector<2x32xf32>
    %261 = math.tanh %260 : vector<2x32xf32>
    %262 = arith.mulf %257, %261 : vector<2x32xf32>
    %263 = arith.index_cast %233 : i32 to index
    %c0_65 = arith.constant 0 : index
    %264 = vector.load %arg13[%263, %c0_65] : memref<16x32xf32, #tpu.memory_space<vmem>>, vector<2x32xf32>
    tpu.vector_store %arg13[%263, %c0_65], %262 {strides = array<i32>} : memref<16x32xf32, #tpu.memory_space<vmem>>, vector<2x32xf32>,
    %c8_i32 = arith.constant 8 : i32
    %c0_66 = arith.constant 0 : index
    %c0_67 = arith.constant 0 : index
    %c0_68 = arith.constant 0 : index
    %265 = vector.load %arg10[%c0_66, %c0_67, %c0_68] : memref<2x2x32xf32, #tpu.memory_space<vmem>>, vector<1x2x32xf32>
    %266 = vector.shape_cast %265 : vector<1x2x32xf32> to vector<2x32xf32>
    %267 = vector.shape_cast %262 : vector<2x32xf32> to vector<1x2x32xf32>
    tpu.vector_store %arg10[%c0_66, %c0_67, %c0_68], %267 {strides = array<i32>} : memref<2x2x32xf32, #tpu.memory_space<vmem>>, vector<1x2x32xf32>,
    %c0_69 = arith.constant 0 : index
    %c0_70 = arith.constant 0 : index
    %c0_71 = arith.constant 0 : index
    %268 = vector.load %arg11[%c0_69, %c0_70, %c0_71] : memref<2x2x32xf32, #tpu.memory_space<vmem>>, vector<1x2x32xf32>
    %269 = vector.shape_cast %268 : vector<1x2x32xf32> to vector<2x32xf32>
    %270 = vector.shape_cast %260 : vector<2x32xf32> to vector<1x2x32xf32>
    tpu.vector_store %arg11[%c0_69, %c0_70, %c0_71], %270 {strides = array<i32>} : memref<2x2x32xf32, #tpu.memory_space<vmem>>, vector<1x2x32xf32>,
    %c0_72 = arith.constant 0 : index
    %c0_73 = arith.constant 0 : index
    %271 = vector.load %arg4[%c0_72, %c0_73] : memref<32x128xf32, #tpu.memory_space<vmem>>, vector<32x128xf32>
    %c0_74 = arith.constant 0 : index
    %c0_75 = arith.constant 0 : index
    %272 = vector.load %arg5[%c0_74, %c0_75] : memref<32x128xf32, #tpu.memory_space<vmem>>, vector<32x128xf32>
    %c0_76 = arith.constant 0 : index
    %c0_77 = arith.constant 0 : index
    %273 = vector.load %arg6[%c0_76, %c0_77] : memref<1x128xf32, #tpu.memory_space<vmem>>, vector<1x128xf32>
    %c0_78 = arith.constant 0 : index
    %c0_79 = arith.constant 0 : index
    %274 = vector.load %arg13[%c0_78, %c0_79] : memref<16x32xf32, #tpu.memory_space<vmem>>, vector<16x32xf32>
    %cst_80 = arith.constant dense<0.000000e+00> : vector<16x128xf32>
    %275 = tpu.matmul %274, %271, %cst_80 {dimension_numbers = #tpu.dot_dimension_numbers<[1], [0], [0], [1], [0, 0, 1, 1], [], []>} : vector<16x32xf32>, vector<32x128xf32>, vector<16x128xf32> -> vector<16x128xf32>
    %276 = vector.broadcast %273 : vector<1x128xf32> to vector<16x128xf32>
    %277 = arith.addf %275, %276 : vector<16x128xf32>
    %c0_81 = arith.constant 0 : index
    %c0_82 = arith.constant 0 : index
    %278 = vector.load %arg12[%c0_81, %c0_82] : memref<16x128xf32, #tpu.memory_space<vmem>>, vector<16x128xf32>
    tpu.vector_store %arg12[%c0_81, %c0_82], %277 {strides = array<i32>} : memref<16x128xf32, #tpu.memory_space<vmem>>, vector<16x128xf32>,
    %cst_83 = arith.constant 0.000000e+00 : f32
    %279 = vector.broadcast %cst_83 : f32 to vector<2x32xf32>
    %c0_i32_84 = arith.constant 0 : i32
    %c2_i32_85 = arith.constant 2 : i32
    %280 = arith.muli %c0_i32_84, %c2_i32_85 : i32
    %281 = arith.index_cast %280 : i32 to index
    %c0_86 = arith.constant 0 : index
    %282 = vector.load %arg12[%281, %c0_86] : memref<16x128xf32, #tpu.memory_space<vmem>>, vector<2x128xf32>
    %cst_87 = arith.constant dense<0.000000e+00> : vector<2x128xf32>
    %283 = tpu.matmul %279, %272, %cst_87 {dimension_numbers = #tpu.dot_dimension_numbers<[1], [0], [0], [1], [0, 0, 1, 1], [], []>} : vector<2x32xf32>, vector<32x128xf32>, vector<2x128xf32> -> vector<2x128xf32>
    %284 = arith.addf %282, %283 : vector<2x128xf32>
    %285 = vector.extract_strided_slice %284 {offsets = [0, 0], sizes = [2, 32], strides = [1, 1]} : vector<2x128xf32> to vector<2x32xf32>
    %286 = arith.negf %285 : vector<2x32xf32>
    %287 = math.exp %286 : vector<2x32xf32>
    %cst_88 = arith.constant 1.000000e+00 : f32
    %288 = vector.broadcast %cst_88 : f32 to vector<2x32xf32>
    %289 = arith.addf %288, %287 : vector<2x32xf32>
    %290 = arith.divf %288, %289 : vector<2x32xf32>
    %291 = vector.extract_strided_slice %284 {offsets = [0, 32], sizes = [2, 32], strides = [1, 1]} : vector<2x128xf32> to vector<2x32xf32>
    %292 = arith.negf %291 : vector<2x32xf32>
    %293 = math.exp %292 : vector<2x32xf32>
    %cst_89 = arith.constant 1.000000e+00 : f32
    %294 = vector.broadcast %cst_89 : f32 to vector<2x32xf32>
    %295 = arith.addf %294, %293 : vector<2x32xf32>
    %296 = arith.divf %294, %295 : vector<2x32xf32>
    %297 = vector.extract_strided_slice %284 {offsets = [0, 64], sizes = [2, 32], strides = [1, 1]} : vector<2x128xf32> to vector<2x32xf32>
    %298 = math.tanh %297 : vector<2x32xf32>
    %299 = vector.extract_strided_slice %284 {offsets = [0, 96], sizes = [2, 32], strides = [1, 1]} : vector<2x128xf32> to vector<2x32xf32>
    %300 = arith.negf %299 : vector<2x32xf32>
    %301 = math.exp %300 : vector<2x32xf32>
    %cst_90 = arith.constant 1.000000e+00 : f32
    %302 = vector.broadcast %cst_90 : f32 to vector<2x32xf32>
    %303 = arith.addf %302, %301 : vector<2x32xf32>
    %304 = arith.divf %302, %303 : vector<2x32xf32>
    %305 = arith.mulf %296, %279 : vector<2x32xf32>
    %306 = arith.mulf %290, %298 : vector<2x32xf32>
    %307 = arith.addf %305, %306 : vector<2x32xf32>
    %308 = math.tanh %307 : vector<2x32xf32>
    %309 = arith.mulf %304, %308 : vector<2x32xf32>
    %c1_i32_91 = arith.constant 1 : i32
    %c2_i32_92 = arith.constant 2 : i32
    %310 = arith.muli %c1_i32_91, %c2_i32_92 : i32
    %311 = arith.index_cast %310 : i32 to index
    %c0_93 = arith.constant 0 : index
    %312 = vector.load %arg12[%311, %c0_93] : memref<16x128xf32, #tpu.memory_space<vmem>>, vector<2x128xf32>
    %cst_94 = arith.constant dense<0.000000e+00> : vector<2x128xf32>
    %313 = tpu.matmul %309, %272, %cst_94 {dimension_numbers = #tpu.dot_dimension_numbers<[1], [0], [0], [1], [0, 0, 1, 1], [], []>} : vector<2x32xf32>, vector<32x128xf32>, vector<2x128xf32> -> vector<2x128xf32>
    %314 = arith.addf %312, %313 : vector<2x128xf32>
    %315 = vector.extract_strided_slice %314 {offsets = [0, 0], sizes = [2, 32], strides = [1, 1]} : vector<2x128xf32> to vector<2x32xf32>
    %316 = arith.negf %315 : vector<2x32xf32>
    %317 = math.exp %316 : vector<2x32xf32>
    %cst_95 = arith.constant 1.000000e+00 : f32
    %318 = vector.broadcast %cst_95 : f32 to vector<2x32xf32>
    %319 = arith.addf %318, %317 : vector<2x32xf32>
    %320 = arith.divf %318, %319 : vector<2x32xf32>
    %321 = vector.extract_strided_slice %314 {offsets = [0, 32], sizes = [2, 32], strides = [1, 1]} : vector<2x128xf32> to vector<2x32xf32>
    %322 = arith.negf %321 : vector<2x32xf32>
    %323 = math.exp %322 : vector<2x32xf32>
    %cst_96 = arith.constant 1.000000e+00 : f32
    %324 = vector.broadcast %cst_96 : f32 to vector<2x32xf32>
    %325 = arith.addf %324, %323 : vector<2x32xf32>
    %326 = arith.divf %324, %325 : vector<2x32xf32>
    %327 = vector.extract_strided_slice %314 {offsets = [0, 64], sizes = [2, 32], strides = [1, 1]} : vector<2x128xf32> to vector<2x32xf32>
    %328 = math.tanh %327 : vector<2x32xf32>
    %329 = vector.extract_strided_slice %314 {offsets = [0, 96], sizes = [2, 32], strides = [1, 1]} : vector<2x128xf32> to vector<2x32xf32>
    %330 = arith.negf %329 : vector<2x32xf32>
    %331 = math.exp %330 : vector<2x32xf32>
    %cst_97 = arith.constant 1.000000e+00 : f32
    %332 = vector.broadcast %cst_97 : f32 to vector<2x32xf32>
    %333 = arith.addf %332, %331 : vector<2x32xf32>
    %334 = arith.divf %332, %333 : vector<2x32xf32>
    %335 = arith.mulf %326, %307 : vector<2x32xf32>
    %336 = arith.mulf %320, %328 : vector<2x32xf32>
    %337 = arith.addf %335, %336 : vector<2x32xf32>
    %338 = math.tanh %337 : vector<2x32xf32>
    %339 = arith.mulf %334, %338 : vector<2x32xf32>
    %c2_i32_98 = arith.constant 2 : i32
    %c2_i32_99 = arith.constant 2 : i32
    %340 = arith.muli %c2_i32_98, %c2_i32_99 : i32
    %341 = arith.index_cast %340 : i32 to index
    %c0_100 = arith.constant 0 : index
    %342 = vector.load %arg12[%341, %c0_100] : memref<16x128xf32, #tpu.memory_space<vmem>>, vector<2x128xf32>
    %cst_101 = arith.constant dense<0.000000e+00> : vector<2x128xf32>
    %343 = tpu.matmul %339, %272, %cst_101 {dimension_numbers = #tpu.dot_dimension_numbers<[1], [0], [0], [1], [0, 0, 1, 1], [], []>} : vector<2x32xf32>, vector<32x128xf32>, vector<2x128xf32> -> vector<2x128xf32>
    %344 = arith.addf %342, %343 : vector<2x128xf32>
    %345 = vector.extract_strided_slice %344 {offsets = [0, 0], sizes = [2, 32], strides = [1, 1]} : vector<2x128xf32> to vector<2x32xf32>
    %346 = arith.negf %345 : vector<2x32xf32>
    %347 = math.exp %346 : vector<2x32xf32>
    %cst_102 = arith.constant 1.000000e+00 : f32
    %348 = vector.broadcast %cst_102 : f32 to vector<2x32xf32>
    %349 = arith.addf %348, %347 : vector<2x32xf32>
    %350 = arith.divf %348, %349 : vector<2x32xf32>
    %351 = vector.extract_strided_slice %344 {offsets = [0, 32], sizes = [2, 32], strides = [1, 1]} : vector<2x128xf32> to vector<2x32xf32>
    %352 = arith.negf %351 : vector<2x32xf32>
    %353 = math.exp %352 : vector<2x32xf32>
    %cst_103 = arith.constant 1.000000e+00 : f32
    %354 = vector.broadcast %cst_103 : f32 to vector<2x32xf32>
    %355 = arith.addf %354, %353 : vector<2x32xf32>
    %356 = arith.divf %354, %355 : vector<2x32xf32>
    %357 = vector.extract_strided_slice %344 {offsets = [0, 64], sizes = [2, 32], strides = [1, 1]} : vector<2x128xf32> to vector<2x32xf32>
    %358 = math.tanh %357 : vector<2x32xf32>
    %359 = vector.extract_strided_slice %344 {offsets = [0, 96], sizes = [2, 32], strides = [1, 1]} : vector<2x128xf32> to vector<2x32xf32>
    %360 = arith.negf %359 : vector<2x32xf32>
    %361 = math.exp %360 : vector<2x32xf32>
    %cst_104 = arith.constant 1.000000e+00 : f32
    %362 = vector.broadcast %cst_104 : f32 to vector<2x32xf32>
    %363 = arith.addf %362, %361 : vector<2x32xf32>
    %364 = arith.divf %362, %363 : vector<2x32xf32>
    %365 = arith.mulf %356, %337 : vector<2x32xf32>
    %366 = arith.mulf %350, %358 : vector<2x32xf32>
    %367 = arith.addf %365, %366 : vector<2x32xf32>
    %368 = math.tanh %367 : vector<2x32xf32>
    %369 = arith.mulf %364, %368 : vector<2x32xf32>
    %c3_i32_105 = arith.constant 3 : i32
    %c2_i32_106 = arith.constant 2 : i32
    %370 = arith.muli %c3_i32_105, %c2_i32_106 : i32
    %371 = arith.index_cast %370 : i32 to index
    %c0_107 = arith.constant 0 : index
    %372 = vector.load %arg12[%371, %c0_107] : memref<16x128xf32, #tpu.memory_space<vmem>>, vector<2x128xf32>
    %cst_108 = arith.constant dense<0.000000e+00> : vector<2x128xf32>
    %373 = tpu.matmul %369, %272, %cst_108 {dimension_numbers = #tpu.dot_dimension_numbers<[1], [0], [0], [1], [0, 0, 1, 1], [], []>} : vector<2x32xf32>, vector<32x128xf32>, vector<2x128xf32> -> vector<2x128xf32>
    %374 = arith.addf %372, %373 : vector<2x128xf32>
    %375 = vector.extract_strided_slice %374 {offsets = [0, 0], sizes = [2, 32], strides = [1, 1]} : vector<2x128xf32> to vector<2x32xf32>
    %376 = arith.negf %375 : vector<2x32xf32>
    %377 = math.exp %376 : vector<2x32xf32>
    %cst_109 = arith.constant 1.000000e+00 : f32
    %378 = vector.broadcast %cst_109 : f32 to vector<2x32xf32>
    %379 = arith.addf %378, %377 : vector<2x32xf32>
    %380 = arith.divf %378, %379 : vector<2x32xf32>
    %381 = vector.extract_strided_slice %374 {offsets = [0, 32], sizes = [2, 32], strides = [1, 1]} : vector<2x128xf32> to vector<2x32xf32>
    %382 = arith.negf %381 : vector<2x32xf32>
    %383 = math.exp %382 : vector<2x32xf32>
    %cst_110 = arith.constant 1.000000e+00 : f32
    %384 = vector.broadcast %cst_110 : f32 to vector<2x32xf32>
    %385 = arith.addf %384, %383 : vector<2x32xf32>
    %386 = arith.divf %384, %385 : vector<2x32xf32>
    %387 = vector.extract_strided_slice %374 {offsets = [0, 64], sizes = [2, 32], strides = [1, 1]} : vector<2x128xf32> to vector<2x32xf32>
    %388 = math.tanh %387 : vector<2x32xf32>
    %389 = vector.extract_strided_slice %374 {offsets = [0, 96], sizes = [2, 32], strides = [1, 1]} : vector<2x128xf32> to vector<2x32xf32>
    %390 = arith.negf %389 : vector<2x32xf32>
    %391 = math.exp %390 : vector<2x32xf32>
    %cst_111 = arith.constant 1.000000e+00 : f32
    %392 = vector.broadcast %cst_111 : f32 to vector<2x32xf32>
    %393 = arith.addf %392, %391 : vector<2x32xf32>
    %394 = arith.divf %392, %393 : vector<2x32xf32>
    %395 = arith.mulf %386, %367 : vector<2x32xf32>
    %396 = arith.mulf %380, %388 : vector<2x32xf32>
    %397 = arith.addf %395, %396 : vector<2x32xf32>
    %398 = math.tanh %397 : vector<2x32xf32>
    %399 = arith.mulf %394, %398 : vector<2x32xf32>
    %c4_i32_112 = arith.constant 4 : i32
    %c2_i32_113 = arith.constant 2 : i32
    %400 = arith.muli %c4_i32_112, %c2_i32_113 : i32
    %401 = arith.index_cast %400 : i32 to index
    %c0_114 = arith.constant 0 : index
    %402 = vector.load %arg12[%401, %c0_114] : memref<16x128xf32, #tpu.memory_space<vmem>>, vector<2x128xf32>
    %cst_115 = arith.constant dense<0.000000e+00> : vector<2x128xf32>
    %403 = tpu.matmul %399, %272, %cst_115 {dimension_numbers = #tpu.dot_dimension_numbers<[1], [0], [0], [1], [0, 0, 1, 1], [], []>} : vector<2x32xf32>, vector<32x128xf32>, vector<2x128xf32> -> vector<2x128xf32>
    %404 = arith.addf %402, %403 : vector<2x128xf32>
    %405 = vector.extract_strided_slice %404 {offsets = [0, 0], sizes = [2, 32], strides = [1, 1]} : vector<2x128xf32> to vector<2x32xf32>
    %406 = arith.negf %405 : vector<2x32xf32>
    %407 = math.exp %406 : vector<2x32xf32>
    %cst_116 = arith.constant 1.000000e+00 : f32
    %408 = vector.broadcast %cst_116 : f32 to vector<2x32xf32>
    %409 = arith.addf %408, %407 : vector<2x32xf32>
    %410 = arith.divf %408, %409 : vector<2x32xf32>
    %411 = vector.extract_strided_slice %404 {offsets = [0, 32], sizes = [2, 32], strides = [1, 1]} : vector<2x128xf32> to vector<2x32xf32>
    %412 = arith.negf %411 : vector<2x32xf32>
    %413 = math.exp %412 : vector<2x32xf32>
    %cst_117 = arith.constant 1.000000e+00 : f32
    %414 = vector.broadcast %cst_117 : f32 to vector<2x32xf32>
    %415 = arith.addf %414, %413 : vector<2x32xf32>
    %416 = arith.divf %414, %415 : vector<2x32xf32>
    %417 = vector.extract_strided_slice %404 {offsets = [0, 64], sizes = [2, 32], strides = [1, 1]} : vector<2x128xf32> to vector<2x32xf32>
    %418 = math.tanh %417 : vector<2x32xf32>
    %419 = vector.extract_strided_slice %404 {offsets = [0, 96], sizes = [2, 32], strides = [1, 1]} : vector<2x128xf32> to vector<2x32xf32>
    %420 = arith.negf %419 : vector<2x32xf32>
    %421 = math.exp %420 : vector<2x32xf32>
    %cst_118 = arith.constant 1.000000e+00 : f32
    %422 = vector.broadcast %cst_118 : f32 to vector<2x32xf32>
    %423 = arith.addf %422, %421 : vector<2x32xf32>
    %424 = arith.divf %422, %423 : vector<2x32xf32>
    %425 = arith.mulf %416, %397 : vector<2x32xf32>
    %426 = arith.mulf %410, %418 : vector<2x32xf32>
    %427 = arith.addf %425, %426 : vector<2x32xf32>
    %428 = math.tanh %427 : vector<2x32xf32>
    %429 = arith.mulf %424, %428 : vector<2x32xf32>
    %c5_i32_119 = arith.constant 5 : i32
    %c2_i32_120 = arith.constant 2 : i32
    %430 = arith.muli %c5_i32_119, %c2_i32_120 : i32
    %431 = arith.index_cast %430 : i32 to index
    %c0_121 = arith.constant 0 : index
    %432 = vector.load %arg12[%431, %c0_121] : memref<16x128xf32, #tpu.memory_space<vmem>>, vector<2x128xf32>
    %cst_122 = arith.constant dense<0.000000e+00> : vector<2x128xf32>
    %433 = tpu.matmul %429, %272, %cst_122 {dimension_numbers = #tpu.dot_dimension_numbers<[1], [0], [0], [1], [0, 0, 1, 1], [], []>} : vector<2x32xf32>, vector<32x128xf32>, vector<2x128xf32> -> vector<2x128xf32>
    %434 = arith.addf %432, %433 : vector<2x128xf32>
    %435 = vector.extract_strided_slice %434 {offsets = [0, 0], sizes = [2, 32], strides = [1, 1]} : vector<2x128xf32> to vector<2x32xf32>
    %436 = arith.negf %435 : vector<2x32xf32>
    %437 = math.exp %436 : vector<2x32xf32>
    %cst_123 = arith.constant 1.000000e+00 : f32
    %438 = vector.broadcast %cst_123 : f32 to vector<2x32xf32>
    %439 = arith.addf %438, %437 : vector<2x32xf32>
    %440 = arith.divf %438, %439 : vector<2x32xf32>
    %441 = vector.extract_strided_slice %434 {offsets = [0, 32], sizes = [2, 32], strides = [1, 1]} : vector<2x128xf32> to vector<2x32xf32>
    %442 = arith.negf %441 : vector<2x32xf32>
    %443 = math.exp %442 : vector<2x32xf32>
    %cst_124 = arith.constant 1.000000e+00 : f32
    %444 = vector.broadcast %cst_124 : f32 to vector<2x32xf32>
    %445 = arith.addf %444, %443 : vector<2x32xf32>
    %446 = arith.divf %444, %445 : vector<2x32xf32>
    %447 = vector.extract_strided_slice %434 {offsets = [0, 64], sizes = [2, 32], strides = [1, 1]} : vector<2x128xf32> to vector<2x32xf32>
    %448 = math.tanh %447 : vector<2x32xf32>
    %449 = vector.extract_strided_slice %434 {offsets = [0, 96], sizes = [2, 32], strides = [1, 1]} : vector<2x128xf32> to vector<2x32xf32>
    %450 = arith.negf %449 : vector<2x32xf32>
    %451 = math.exp %450 : vector<2x32xf32>
    %cst_125 = arith.constant 1.000000e+00 : f32
    %452 = vector.broadcast %cst_125 : f32 to vector<2x32xf32>
    %453 = arith.addf %452, %451 : vector<2x32xf32>
    %454 = arith.divf %452, %453 : vector<2x32xf32>
    %455 = arith.mulf %446, %427 : vector<2x32xf32>
    %456 = arith.mulf %440, %448 : vector<2x32xf32>
    %457 = arith.addf %455, %456 : vector<2x32xf32>
    %458 = math.tanh %457 : vector<2x32xf32>
    %459 = arith.mulf %454, %458 : vector<2x32xf32>
    %c6_i32_126 = arith.constant 6 : i32
    %c2_i32_127 = arith.constant 2 : i32
    %460 = arith.muli %c6_i32_126, %c2_i32_127 : i32
    %461 = arith.index_cast %460 : i32 to index
    %c0_128 = arith.constant 0 : index
    %462 = vector.load %arg12[%461, %c0_128] : memref<16x128xf32, #tpu.memory_space<vmem>>, vector<2x128xf32>
    %cst_129 = arith.constant dense<0.000000e+00> : vector<2x128xf32>
    %463 = tpu.matmul %459, %272, %cst_129 {dimension_numbers = #tpu.dot_dimension_numbers<[1], [0], [0], [1], [0, 0, 1, 1], [], []>} : vector<2x32xf32>, vector<32x128xf32>, vector<2x128xf32> -> vector<2x128xf32>
    %464 = arith.addf %462, %463 : vector<2x128xf32>
    %465 = vector.extract_strided_slice %464 {offsets = [0, 0], sizes = [2, 32], strides = [1, 1]} : vector<2x128xf32> to vector<2x32xf32>
    %466 = arith.negf %465 : vector<2x32xf32>
    %467 = math.exp %466 : vector<2x32xf32>
    %cst_130 = arith.constant 1.000000e+00 : f32
    %468 = vector.broadcast %cst_130 : f32 to vector<2x32xf32>
    %469 = arith.addf %468, %467 : vector<2x32xf32>
    %470 = arith.divf %468, %469 : vector<2x32xf32>
    %471 = vector.extract_strided_slice %464 {offsets = [0, 32], sizes = [2, 32], strides = [1, 1]} : vector<2x128xf32> to vector<2x32xf32>
    %472 = arith.negf %471 : vector<2x32xf32>
    %473 = math.exp %472 : vector<2x32xf32>
    %cst_131 = arith.constant 1.000000e+00 : f32
    %474 = vector.broadcast %cst_131 : f32 to vector<2x32xf32>
    %475 = arith.addf %474, %473 : vector<2x32xf32>
    %476 = arith.divf %474, %475 : vector<2x32xf32>
    %477 = vector.extract_strided_slice %464 {offsets = [0, 64], sizes = [2, 32], strides = [1, 1]} : vector<2x128xf32> to vector<2x32xf32>
    %478 = math.tanh %477 : vector<2x32xf32>
    %479 = vector.extract_strided_slice %464 {offsets = [0, 96], sizes = [2, 32], strides = [1, 1]} : vector<2x128xf32> to vector<2x32xf32>
    %480 = arith.negf %479 : vector<2x32xf32>
    %481 = math.exp %480 : vector<2x32xf32>
    %cst_132 = arith.constant 1.000000e+00 : f32
    %482 = vector.broadcast %cst_132 : f32 to vector<2x32xf32>
    %483 = arith.addf %482, %481 : vector<2x32xf32>
    %484 = arith.divf %482, %483 : vector<2x32xf32>
    %485 = arith.mulf %476, %457 : vector<2x32xf32>
    %486 = arith.mulf %470, %478 : vector<2x32xf32>
    %487 = arith.addf %485, %486 : vector<2x32xf32>
    %488 = math.tanh %487 : vector<2x32xf32>
    %489 = arith.mulf %484, %488 : vector<2x32xf32>
    %c7_i32_133 = arith.constant 7 : i32
    %c2_i32_134 = arith.constant 2 : i32
    %490 = arith.muli %c7_i32_133, %c2_i32_134 : i32
    %491 = arith.index_cast %490 : i32 to index
    %c0_135 = arith.constant 0 : index
    %492 = vector.load %arg12[%491, %c0_135] : memref<16x128xf32, #tpu.memory_space<vmem>>, vector<2x128xf32>
    %cst_136 = arith.constant dense<0.000000e+00> : vector<2x128xf32>
    %493 = tpu.matmul %489, %272, %cst_136 {dimension_numbers = #tpu.dot_dimension_numbers<[1], [0], [0], [1], [0, 0, 1, 1], [], []>} : vector<2x32xf32>, vector<32x128xf32>, vector<2x128xf32> -> vector<2x128xf32>
    %494 = arith.addf %492, %493 : vector<2x128xf32>
    %495 = vector.extract_strided_slice %494 {offsets = [0, 0], sizes = [2, 32], strides = [1, 1]} : vector<2x128xf32> to vector<2x32xf32>
    %496 = arith.negf %495 : vector<2x32xf32>
    %497 = math.exp %496 : vector<2x32xf32>
    %cst_137 = arith.constant 1.000000e+00 : f32
    %498 = vector.broadcast %cst_137 : f32 to vector<2x32xf32>
    %499 = arith.addf %498, %497 : vector<2x32xf32>
    %500 = arith.divf %498, %499 : vector<2x32xf32>
    %501 = vector.extract_strided_slice %494 {offsets = [0, 32], sizes = [2, 32], strides = [1, 1]} : vector<2x128xf32> to vector<2x32xf32>
    %502 = arith.negf %501 : vector<2x32xf32>
    %503 = math.exp %502 : vector<2x32xf32>
    %cst_138 = arith.constant 1.000000e+00 : f32
    %504 = vector.broadcast %cst_138 : f32 to vector<2x32xf32>
    %505 = arith.addf %504, %503 : vector<2x32xf32>
    %506 = arith.divf %504, %505 : vector<2x32xf32>
    %507 = vector.extract_strided_slice %494 {offsets = [0, 64], sizes = [2, 32], strides = [1, 1]} : vector<2x128xf32> to vector<2x32xf32>
    %508 = math.tanh %507 : vector<2x32xf32>
    %509 = vector.extract_strided_slice %494 {offsets = [0, 96], sizes = [2, 32], strides = [1, 1]} : vector<2x128xf32> to vector<2x32xf32>
    %510 = arith.negf %509 : vector<2x32xf32>
    %511 = math.exp %510 : vector<2x32xf32>
    %cst_139 = arith.constant 1.000000e+00 : f32
    %512 = vector.broadcast %cst_139 : f32 to vector<2x32xf32>
    %513 = arith.addf %512, %511 : vector<2x32xf32>
    %514 = arith.divf %512, %513 : vector<2x32xf32>
    %515 = arith.mulf %506, %487 : vector<2x32xf32>
    %516 = arith.mulf %500, %508 : vector<2x32xf32>
    %517 = arith.addf %515, %516 : vector<2x32xf32>
    %518 = math.tanh %517 : vector<2x32xf32>
    %519 = arith.mulf %514, %518 : vector<2x32xf32>
    %c8_i32_140 = arith.constant 8 : i32
    %c1 = arith.constant 1 : index
    %c0_141 = arith.constant 0 : index
    %c0_142 = arith.constant 0 : index
    %520 = vector.load %arg10[%c1, %c0_141, %c0_142] : memref<2x2x32xf32, #tpu.memory_space<vmem>>, vector<1x2x32xf32>
    %521 = vector.shape_cast %520 : vector<1x2x32xf32> to vector<2x32xf32>
    %522 = vector.shape_cast %519 : vector<2x32xf32> to vector<1x2x32xf32>
    tpu.vector_store %arg10[%c1, %c0_141, %c0_142], %522 {strides = array<i32>} : memref<2x2x32xf32, #tpu.memory_space<vmem>>, vector<1x2x32xf32>,
    %c1_143 = arith.constant 1 : index
    %c0_144 = arith.constant 0 : index
    %c0_145 = arith.constant 0 : index
    %523 = vector.load %arg11[%c1_143, %c0_144, %c0_145] : memref<2x2x32xf32, #tpu.memory_space<vmem>>, vector<1x2x32xf32>
    %524 = vector.shape_cast %523 : vector<1x2x32xf32> to vector<2x32xf32>
    %525 = vector.shape_cast %517 : vector<2x32xf32> to vector<1x2x32xf32>
    tpu.vector_store %arg11[%c1_143, %c0_144, %c0_145], %525 {strides = array<i32>} : memref<2x2x32xf32, #tpu.memory_space<vmem>>, vector<1x2x32xf32>,
    %c0_146 = arith.constant 0 : index
    %c0_147 = arith.constant 0 : index
    %526 = vector.load %arg7[%c0_146, %c0_147] : memref<32x128xf32, #tpu.memory_space<vmem>>, vector<32x128xf32>
    %cst_148 = arith.constant dense<0.000000e+00> : vector<2x128xf32>
    %527 = tpu.matmul %519, %526, %cst_148 {dimension_numbers = #tpu.dot_dimension_numbers<[1], [0], [0], [1], [0, 0, 1, 1], [], []>} : vector<2x32xf32>, vector<32x128xf32>, vector<2x128xf32> -> vector<2x128xf32>
    %c0_149 = arith.constant 0 : index
    %c0_150 = arith.constant 0 : index
    %528 = vector.load %arg8[%c0_149, %c0_150] : memref<1x128xf32, #tpu.memory_space<vmem>>, vector<1x128xf32>
    %529 = vector.broadcast %528 : vector<1x128xf32> to vector<2x128xf32>
    %530 = arith.addf %527, %529 : vector<2x128xf32>
    %c0_151 = arith.constant 0 : index
    %c0_152 = arith.constant 0 : index
    %531 = vector.load %arg9[%c0_151, %c0_152] : memref<2x128xf32, #tpu.memory_space<vmem>>, vector<2x128xf32>
    tpu.vector_store %arg9[%c0_151, %c0_152], %530 {strides = array<i32>} : memref<2x128xf32, #tpu.memory_space<vmem>>, vector<2x128xf32>,
    return
  }
}

</mosaic_0001>

<llo_original>
// kernel: _lambda_.1
$region0: #{_lambda_.1}
  #allocation0 [shape = 'u32[]', space=smem, size = 0x4, offset = 0x4, fixed_abs, tag = 'smem constant byte address 0x4 - core index']
  #allocation1 [shape = 'u32[144,128]{1,0:T(1,128)}', space=vmem, size = 0x12000, scoped, tag = 'internal scratch']
  #allocation2 [shape = 'f32[16,128]{1,0:T(8,128)}', space=vmem, size = 0x2000, scoped, tag = 'scratch operand']
  #allocation3 [shape = 'f32[16,32]{1,0:T(8,128)}', space=vmem, size = 0x2000, scoped, tag = 'scratch operand']
  %s0 = inlined_call_operand.vmem [shape: f32[16,16], index: 0, kind: input, shape index: {}]
  %s1 = inlined_call_operand.vmem [shape: f32[16,128], index: 1, kind: input, shape index: {}]
  %s2 = inlined_call_operand.vmem [shape: f32[32,128], index: 2, kind: input, shape index: {}]
  %s3 = inlined_call_operand.vmem [shape: f32[1,128], index: 3, kind: input, shape index: {}]
  %s4 = inlined_call_operand.vmem [shape: f32[32,128], index: 4, kind: input, shape index: {}]
  %s5 = inlined_call_operand.vmem [shape: f32[32,128], index: 5, kind: input, shape index: {}]
  %s6 = inlined_call_operand.vmem [shape: f32[1,128], index: 6, kind: input, shape index: {}]
  %s7 = inlined_call_operand.vmem [shape: f32[32,128], index: 7, kind: input, shape index: {}]
  %s8 = inlined_call_operand.vmem [shape: f32[1,128], index: 8, kind: input, shape index: {}]
  %s9 = inlined_call_operand.hbm [shape: f32[2,128], index: 9, kind: output, shape index: {0}]
  %s10 = inlined_call_operand.hbm [shape: f32[2,2,32], index: 10, kind: output, shape index: {1}]
  %s11 = inlined_call_operand.hbm [shape: f32[2,2,32], index: 11, kind: output, shape index: {2}]
  %12 = xla_tuple %s9, %s10, %s11
  %s13 = sld [smem:[#allocation0]]
  $region62: #{_lambda_.1} parent=0
    _
  %s15 = ssub.s32 1, %s13
  %s16 = scalar_select 0, %s15, %s13
  $region1: #{_lambda_.1} parent=0
    #allocation4 [shape = 'u8[1024]{0}', space=vmem, size = 0x400, scoped, tag = 'output window, operand 0, single buffered']
    #allocation5 [shape = 's32[1]{0}', space=sflag, size = 0x4, scoped, tag = 'scoped memory for _lambda_.1']
    #allocation6 [shape = 'u8[2048]{0}', space=vmem, size = 0x800, scoped, tag = 'output window, operand 1, single buffered']
    #allocation7 [shape = 's32[1]{0}', space=sflag, size = 0x4, scoped, tag = 'scoped memory for _lambda_.1']
    #allocation8 [shape = 'u8[2048]{0}', space=vmem, size = 0x800, scoped, tag = 'output window, operand 2, single buffered']
    %17 = vsyncpa [#allocation5], 0
    %18 = vsyncpa [#allocation7], 0
    // Predicated region
    $region2: #{_lambda_.1} parent=1 // pred_check
      _
    $region3: #{_lambda_.1} parent=1 // pred_check_branch
      %20 = sbr.rel (0) target = $region5
    $region4: #{_lambda_.1} parent=1 // pred_region
      _
    $region5: #{_lambda_.1} parent=1 // pred_fallthru
      _
    // Predicated region
    $region6: #{_lambda_.1} parent=1 // pred_check
      _
    $region7: #{_lambda_.1} parent=1 // pred_check_branch
      %22 = sbr.rel (0) target = $region9
    $region8: #{_lambda_.1} parent=1 // pred_region
      _
    $region9: #{_lambda_.1} parent=1 // pred_fallthru
      _
    // Predicated region
    $region10: #{_lambda_.1} parent=1 // pred_check
      _
    $region11: #{_lambda_.1} parent=1 // pred_check_branch
      %24 = sbr.rel (0) target = $region13
    $region12: #{_lambda_.1} parent=1 // pred_region
      _
    $region13: #{_lambda_.1} parent=1 // pred_fallthru
      _
    // Predicated region
    $region14: #{_lambda_.1} parent=1 // pred_check
      _
    $region15: #{_lambda_.1} parent=1 // pred_check_branch
      %26 = sbr.rel (0) target = $region17
    $region16: #{_lambda_.1} parent=1 // pred_region
      _
    $region17: #{_lambda_.1} parent=1 // pred_fallthru
      _
    // Predicated region
    $region18: #{_lambda_.1} parent=1 // pred_check
      _
    $region19: #{_lambda_.1} parent=1 // pred_check_branch
      %28 = sbr.rel (0) target = $region21
    $region20: #{_lambda_.1} parent=1 // pred_region
      _
    $region21: #{_lambda_.1} parent=1 // pred_fallthru
      _
    // Predicated region
    $region22: #{_lambda_.1} parent=1 // pred_check
      _
    $region23: #{_lambda_.1} parent=1 // pred_check_branch
      %30 = sbr.rel (0) target = $region25
    $region24: #{_lambda_.1} parent=1 // pred_region
      _
    $region25: #{_lambda_.1} parent=1 // pred_fallthru
      _
    // Predicated region
    $region26: #{_lambda_.1} parent=1 // pred_check
      _
    $region27: #{_lambda_.1} parent=1 // pred_check_branch
      %32 = sbr.rel (0) target = $region29
    $region28: #{_lambda_.1} parent=1 // pred_region
      _
    $region29: #{_lambda_.1} parent=1 // pred_fallthru
      _
    // Predicated region
    $region30: #{_lambda_.1} parent=1 // pred_check
      _
    $region31: #{_lambda_.1} parent=1 // pred_check_branch
      %34 = sbr.rel (0) target = $region33
    $region32: #{_lambda_.1} parent=1 // pred_region
      _
    $region33: #{_lambda_.1} parent=1 // pred_fallthru
      _
    // Predicated region
    $region34: #{_lambda_.1} parent=1 // pred_check
      _
    $region35: #{_lambda_.1} parent=1 // pred_check_branch
      %36 = sbr.rel (0) target = $region37
    $region36: #{_lambda_.1} parent=1 // pred_region
      _
    $region37: #{_lambda_.1} parent=1 // pred_fallthru
      _
    %v37 = vld [vmem:[%s1] sm:$0xff]
    %v38 = vld [vmem:[%s1 + $0x8] sm:$0xff]
    %v39 = vld [vmem:[%s2] sm:$0xff]
    %v40 = vld [vmem:[%s2 + $0x8] sm:$0xff]
    %v41 = vld [vmem:[%s2 + $0x10] sm:$0xff]
    %v42 = vld [vmem:[%s2 + $0x18] sm:$0xff]
    %v43 = vld [vmem:[%s3] sm:$0x1]
    %v44 = vld [vmem:[%s0] sm:$0xff]
    %v45 = vld [vmem:[%s0 + $0x8] sm:$0xff]
    %v47 = vlaneseq
    %v48 = vshrl.u32 %v47, 7
    %v49 = vsub.s32 0, %v48
    %v50 = vrot.slane %v43, %v49
    %vm52 = vcmask 130048
    %v54 = vsel %vm52, %v44, 0
    %v57 = vsel %vm52, %v45, 0
    %59 = vmatprep.subr.mxu0 0.0
    %60 = vmatpush1.msra.mxu0 %v37
    %61 = vmatprep.subr.mxu0 0.0
    %62 = vmatpush1.msra.mxu0 %v38
    %63 = vmatprep.subr.mxu0 0.0
    %64 = vmatpush1.msra.mxu0 0.0
    %65 = vmatprep.subr.mxu0 0.0
    %66 = vmatpush1.msra.mxu0 0.0
    %67 = vmatprep.subr.mxu0 0.0
    %68 = vmatpush1.msra.mxu0 0.0
    %69 = vmatprep.subr.mxu0 0.0
    %70 = vmatpush1.msra.mxu0 0.0
    %71 = vmatprep.subr.mxu0 0.0
    %72 = vmatpush1.msra.mxu0 0.0
    %73 = vmatprep.subr.mxu0 0.0
    %74 = vmatpush1.msra.mxu0 0.0
    %75 = vmatprep.subr.mxu0 0.0
    %76 = vmatpush1.msra.mxu0 0.0
    %77 = vmatprep.subr.mxu0 0.0
    %78 = vmatpush1.msra.mxu0 0.0
    %79 = vmatprep.subr.mxu0 0.0
    %80 = vmatpush1.msra.mxu0 0.0
    %81 = vmatprep.subr.mxu0 0.0
    %82 = vmatpush1.msra.mxu0 0.0
    %83 = vmatprep.subr.mxu0 0.0
    %84 = vmatpush1.msra.mxu0 0.0
    %85 = vmatprep.subr.mxu0 0.0
    %86 = vmatpush1.msra.mxu0 0.0
    %87 = vmatprep.subr.mxu0 0.0
    %88 = vmatpush1.msra.mxu0 0.0
    %89 = vmatprep.subr.mxu0 0.0
    %90 = vmatpush1.msra.mxu0 0.0
    %91 = vmatprep.subr.mxu0 0.0
    %92 = vmatpush1.msra.mxu0 0.0
    %93 = vmatprep.subr.mxu0 0.0
    %94 = vmatpush1.msra.mxu0 0.0
    %95 = vmatprep.subr.mxu0 0.0
    %96 = vmatpush1.msra.mxu0 0.0
    %97 = vmatprep.subr.mxu0 0.0
    %98 = vmatpush1.msra.mxu0 0.0
    %99 = vmatprep.subr.mxu0 0.0
    %100 = vmatpush1.msra.mxu0 0.0
    %101 = vmatprep.subr.mxu0 0.0
    %102 = vmatpush1.msra.mxu0 0.0
    %103 = vmatprep.subr.mxu0 0.0
    %104 = vmatpush1.msra.mxu0 0.0
    %105 = vmatprep.subr.mxu0 0.0
    %106 = vmatpush1.msra.mxu0 0.0
    %107 = vmatprep.subr.mxu0 0.0
    %108 = vmatpush1.msra.mxu0 0.0
    %109 = vmatprep.subr.mxu0 0.0
    %110 = vmatpush1.msra.mxu0 0.0
    %111 = vmatprep.subr.mxu0 0.0
    %112 = vmatpush1.msra.mxu0 0.0
    %113 = vmatprep.subr.mxu0 0.0
    %114 = vmatpush1.msra.mxu0 0.0
    %115 = vmatprep.subr.mxu0 0.0
    %116 = vmatpush1.msra.mxu0 0.0
    %117 = vmatprep.subr.mxu0 0.0
    %118 = vmatpush1.msra.mxu0 0.0
    %119 = vmatprep.subr.mxu0 0.0
    %120 = vmatpush1.msra.mxu0 0.0
    %121 = vmatprep.subr.mxu0 0.0
    %122 = vmatpush1.msra.mxu0 0.0
    %123 = vmatprep.mubr.f32.mxu0 0.0
    %124 = vmatmul.mubr.f32.gmra.mrb[0].mxu0 %v54
    %v125 = vpop.f32.mrb[0].mxu0
    %v126 = vadd.f32 %v50, %v125
    %v127 = vpop.f32.mrb[0].mxu0
    %128 = vmatprep.mubr.f32.mxu0 0.0
    %129 = vmatmul.mubr.f32.gmra.mrb[0].mxu0 %v57
    %v130 = vpop.f32.mrb[0].mxu0
    %v131 = vadd.f32 %v50, %v130
    %v132 = vpop.f32.mrb[0].mxu0
    %133 = vdwg.mxu0
    %134 = vst [vmem:[#allocation2] sm:$0xff] %v126
    %135 = vst [vmem:[#allocation2 + $0x8] sm:$0xff] %v131
    %v136 = vld [vmem:[#allocation2] sm:$0x3]
    %vm137 = vcmask 261120
    %v139 = vsel %vm137, 0.0, 0
    %141 = vmatprep.subr.mxu0 0.0
    %142 = vmatpush1.msra.mxu0 %v39
    %143 = vmatprep.subr.mxu0 0.0
    %144 = vmatpush1.msra.mxu0 %v40
    %145 = vmatprep.subr.mxu0 0.0
    %146 = vmatpush1.msra.mxu0 %v41
    %147 = vmatprep.subr.mxu0 0.0
    %148 = vmatpush1.msra.mxu0 %v42
    %149 = vmatprep.subr.mxu0 0.0
    %150 = vmatpush1.msra.mxu0 0.0
    %151 = vmatprep.subr.mxu0 0.0
    %152 = vmatpush1.msra.mxu0 0.0
    %153 = vmatprep.subr.mxu0 0.0
    %154 = vmatpush1.msra.mxu0 0.0
    %155 = vmatprep.subr.mxu0 0.0
    %156 = vmatpush1.msra.mxu0 0.0
    %157 = vmatprep.subr.mxu0 0.0
    %158 = vmatpush1.msra.mxu0 0.0
    %159 = vmatprep.subr.mxu0 0.0
    %160 = vmatpush1.msra.mxu0 0.0
    %161 = vmatprep.subr.mxu0 0.0
    %162 = vmatpush1.msra.mxu0 0.0
    %163 = vmatprep.subr.mxu0 0.0
    %164 = vmatpush1.msra.mxu0 0.0
    %165 = vmatprep.subr.mxu0 0.0
    %166 = vmatpush1.msra.mxu0 0.0
    %167 = vmatprep.subr.mxu0 0.0
    %168 = vmatpush1.msra.mxu0 0.0
    %169 = vmatprep.subr.mxu0 0.0
    %170 = vmatpush1.msra.mxu0 0.0
    %171 = vmatprep.subr.mxu0 0.0
    %172 = vmatpush1.msra.mxu0 0.0
    %173 = vmatprep.subr.mxu0 0.0
    %174 = vmatpush1.msra.mxu0 0.0
    %175 = vmatprep.subr.mxu0 0.0
    %176 = vmatpush1.msra.mxu0 0.0
    %177 = vmatprep.subr.mxu0 0.0
    %178 = vmatpush1.msra.mxu0 0.0
    %179 = vmatprep.subr.mxu0 0.0
    %180 = vmatpush1.msra.mxu0 0.0
    %181 = vmatprep.subr.mxu0 0.0
    %182 = vmatpush1.msra.mxu0 0.0
    %183 = vmatprep.subr.mxu0 0.0
    %184 = vmatpush1.msra.mxu0 0.0
    %185 = vmatprep.subr.mxu0 0.0
    %186 = vmatpush1.msra.mxu0 0.0
    %187 = vmatprep.subr.mxu0 0.0
    %188 = vmatpush1.msra.mxu0 0.0
    %189 = vmatprep.subr.mxu0 0.0
    %190 = vmatpush1.msra.mxu0 0.0
    %191 = vmatprep.subr.mxu0 0.0
    %192 = vmatpush1.msra.mxu0 0.0
    %193 = vmatprep.subr.mxu0 0.0
    %194 = vmatpush1.msra.mxu0 0.0
    %195 = vmatprep.subr.mxu0 0.0
    %196 = vmatpush1.msra.mxu0 0.0
    %197 = vmatprep.subr.mxu0 0.0
    %198 = vmatpush1.msra.mxu0 0.0
    %199 = vmatprep.subr.mxu0 0.0
    %200 = vmatpush1.msra.mxu0 0.0
    %201 = vmatprep.subr.mxu0 0.0
    %202 = vmatpush1.msra.mxu0 0.0
    %203 = vmatprep.subr.mxu0 0.0
    %204 = vmatpush1.msra.mxu0 0.0
    %205 = vmatprep.mubr.f32.mxu0 0.0
    %206 = vmatmul.mubr.f32.gmra.mrb[0].mxu0 %v139
    %v207 = vpop.f32.mrb[0].mxu0
    %v208 = vadd.f32 0.0, %v207
    %v209 = vpop.f32.mrb[0].mxu0
    %210 = vdwg.mxu0
    %v211 = vadd.f32 %v136, %v208
    %v212 = vxor.u32 %v211, 2147483648
    %v213 = vmul.f32 %v212, 1.442695
    %v214 = vpow.pop %v213
    %v215 = vadd.f32 %v214, 1.0
    %v216 = vrcp.pop %v215
    %v217 = vmul.f32 1.0, %v216
    %v218 = vtanh.pop %v211
    %v219 = vmul.f32 %v217, 0.0
    %221 = vrot.lane.b32.xlu0 %v218, 64
    %v222 = vpop.permute.xlu0 %221
    %v224 = vmul.f32 %v217, %v222
    %226 = vrot.lane.b32.xlu0 %v224, 32
    %v227 = vpop.permute.xlu0 %226
    %v229 = vadd.f32 %v219, %v227
    %v230 = vtanh.pop %v229
    %232 = vrot.lane.b32.xlu0 %v230, 64
    %v233 = vpop.permute.xlu0 %232
    %v235 = vmul.f32 %v217, %v233
    %237 = vrot.lane.b32.xlu0 %v235, 32
    %v238 = vpop.permute.xlu0 %237
    %vm240 = vcmask 254976
    %241 = vst.msk [vmem:[#allocation3] sm:$0x3] %vm240, %v238
    %v242 = vld [vmem:[#allocation2 + $0x2] sm:$0x3]
    %v243 = vsel %vm137, %v238, 0
    %245 = vmatprep.subr.mxu0 0.0
    %246 = vmatpush1.msra.mxu0 %v39
    %247 = vmatprep.subr.mxu0 0.0
    %248 = vmatpush1.msra.mxu0 %v40
    %249 = vmatprep.subr.mxu0 0.0
    %250 = vmatpush1.msra.mxu0 %v41
    %251 = vmatprep.subr.mxu0 0.0
    %252 = vmatpush1.msra.mxu0 %v42
    %253 = vmatprep.subr.mxu0 0.0
    %254 = vmatpush1.msra.mxu0 0.0
    %255 = vmatprep.subr.mxu0 0.0
    %256 = vmatpush1.msra.mxu0 0.0
    %257 = vmatprep.subr.mxu0 0.0
    %258 = vmatpush1.msra.mxu0 0.0
    %259 = vmatprep.subr.mxu0 0.0
    %260 = vmatpush1.msra.mxu0 0.0
    %261 = vmatprep.subr.mxu0 0.0
    %262 = vmatpush1.msra.mxu0 0.0
    %263 = vmatprep.subr.mxu0 0.0
    %264 = vmatpush1.msra.mxu0 0.0
    %265 = vmatprep.subr.mxu0 0.0
    %266 = vmatpush1.msra.mxu0 0.0
    %267 = vmatprep.subr.mxu0 0.0
    %268 = vmatpush1.msra.mxu0 0.0
    %269 = vmatprep.subr.mxu0 0.0
    %270 = vmatpush1.msra.mxu0 0.0
    %271 = vmatprep.subr.mxu0 0.0
    %272 = vmatpush1.msra.mxu0 0.0
    %273 = vmatprep.subr.mxu0 0.0
    %274 = vmatpush1.msra.mxu0 0.0
    %275 = vmatprep.subr.mxu0 0.0
    %276 = vmatpush1.msra.mxu0 0.0
    %277 = vmatprep.subr.mxu0 0.0
    %278 = vmatpush1.msra.mxu0 0.0
    %279 = vmatprep.subr.mxu0 0.0
    %280 = vmatpush1.msra.mxu0 0.0
    %281 = vmatprep.subr.mxu0 0.0
    %282 = vmatpush1.msra.mxu0 0.0
    %283 = vmatprep.subr.mxu0 0.0
    %284 = vmatpush1.msra.mxu0 0.0
    %285 = vmatprep.subr.mxu0 0.0
    %286 = vmatpush1.msra.mxu0 0.0
    %287 = vmatprep.subr.mxu0 0.0
    %288 = vmatpush1.msra.mxu0 0.0
    %289 = vmatprep.subr.mxu0 0.0
    %290 = vmatpush1.msra.mxu0 0.0
    %291 = vmatprep.subr.mxu0 0.0
    %292 = vmatpush1.msra.mxu0 0.0
    %293 = vmatprep.subr.mxu0 0.0
    %294 = vmatpush1.msra.mxu0 0.0
    %295 = vmatprep.subr.mxu0 0.0
    %296 = vmatpush1.msra.mxu0 0.0
    %297 = vmatprep.subr.mxu0 0.0
    %298 = vmatpush1.msra.mxu0 0.0
    %299 = vmatprep.subr.mxu0 0.0
    %300 = vmatpush1.msra.mxu0 0.0
    %301 = vmatprep.subr.mxu0 0.0
    %302 = vmatpush1.msra.mxu0 0.0
    %303 = vmatprep.subr.mxu0 0.0
    %304 = vmatpush1.msra.mxu0 0.0
    %305 = vmatprep.subr.mxu0 0.0
    %306 = vmatpush1.msra.mxu0 0.0
    %307 = vmatprep.subr.mxu0 0.0
    %308 = vmatpush1.msra.mxu0 0.0
    %309 = vmatprep.mubr.f32.mxu0 0.0
    %310 = vmatmul.mubr.f32.gmra.mrb[0].mxu0 %v243
    %v311 = vpop.f32.mrb[0].mxu0
    %v312 = vadd.f32 0.0, %v311
    %v313 = vpop.f32.mrb[0].mxu0
    %314 = vdwg.mxu0
    %v315 = vadd.f32 %v242, %v312
    %v316 = vxor.u32 %v315, 2147483648
    %v317 = vmul.f32 %v316, 1.442695
    %v318 = vpow.pop %v317
    %v319 = vadd.f32 %v318, 1.0
    %v320 = vrcp.pop %v319
    %v321 = vmul.f32 1.0, %v320
    %v322 = vtanh.pop %v315
    %v323 = vmul.f32 %v321, %v229
    %325 = vrot.lane.b32.xlu0 %v322, 64
    %v326 = vpop.permute.xlu0 %325
    %v328 = vmul.f32 %v321, %v326
    %330 = vrot.lane.b32.xlu0 %v328, 32
    %v331 = vpop.permute.xlu0 %330
    %v333 = vadd.f32 %v323, %v331
    %v334 = vtanh.pop %v333
    %336 = vrot.lane.b32.xlu0 %v334, 64
    %v337 = vpop.permute.xlu0 %336
    %v339 = vmul.f32 %v321, %v337
    %341 = vrot.lane.b32.xlu0 %v339, 32
    %v342 = vpop.permute.xlu0 %341
    %344 = vst.msk [vmem:[#allocation3 + $0x2] sm:$0x3] %vm240, %v342
    %v345 = vld [vmem:[#allocation2 + $0x4] sm:$0x3]
    %v346 = vsel %vm137, %v342, 0
    %348 = vmatprep.subr.mxu0 0.0
    %349 = vmatpush1.msra.mxu0 %v39
    %350 = vmatprep.subr.mxu0 0.0
    %351 = vmatpush1.msra.mxu0 %v40
    %352 = vmatprep.subr.mxu0 0.0
    %353 = vmatpush1.msra.mxu0 %v41
    %354 = vmatprep.subr.mxu0 0.0
    %355 = vmatpush1.msra.mxu0 %v42
    %356 = vmatprep.subr.mxu0 0.0
    %357 = vmatpush1.msra.mxu0 0.0
    %358 = vmatprep.subr.mxu0 0.0
    %359 = vmatpush1.msra.mxu0 0.0
    %360 = vmatprep.subr.mxu0 0.0
    %361 = vmatpush1.msra.mxu0 0.0
    %362 = vmatprep.subr.mxu0 0.0
    %363 = vmatpush1.msra.mxu0 0.0
    %364 = vmatprep.subr.mxu0 0.0
    %365 = vmatpush1.msra.mxu0 0.0
    %366 = vmatprep.subr.mxu0 0.0
    %367 = vmatpush1.msra.mxu0 0.0
    %368 = vmatprep.subr.mxu0 0.0
    %369 = vmatpush1.msra.mxu0 0.0
    %370 = vmatprep.subr.mxu0 0.0
    %371 = vmatpush1.msra.mxu0 0.0
    %372 = vmatprep.subr.mxu0 0.0
    %373 = vmatpush1.msra.mxu0 0.0
    %374 = vmatprep.subr.mxu0 0.0
    %375 = vmatpush1.msra.mxu0 0.0
    %376 = vmatprep.subr.mxu0 0.0
    %377 = vmatpush1.msra.mxu0 0.0
    %378 = vmatprep.subr.mxu0 0.0
    %379 = vmatpush1.msra.mxu0 0.0
    %380 = vmatprep.subr.mxu0 0.0
    %381 = vmatpush1.msra.mxu0 0.0
    %382 = vmatprep.subr.mxu0 0.0
    %383 = vmatpush1.msra.mxu0 0.0
    %384 = vmatprep.subr.mxu0 0.0
    %385 = vmatpush1.msra.mxu0 0.0
    %386 = vmatprep.subr.mxu0 0.0
    %387 = vmatpush1.msra.mxu0 0.0
    %388 = vmatprep.subr.mxu0 0.0
    %389 = vmatpush1.msra.mxu0 0.0
    %390 = vmatprep.subr.mxu0 0.0
    %391 = vmatpush1.msra.mxu0 0.0
    %392 = vmatprep.subr.mxu0 0.0
    %393 = vmatpush1.msra.mxu0 0.0
    %394 = vmatprep.subr.mxu0 0.0
    %395 = vmatpush1.msra.mxu0 0.0
    %396 = vmatprep.subr.mxu0 0.0
    %397 = vmatpush1.msra.mxu0 0.0
    %398 = vmatprep.subr.mxu0 0.0
    %399 = vmatpush1.msra.mxu0 0.0
    %400 = vmatprep.subr.mxu0 0.0
    %401 = vmatpush1.msra.mxu0 0.0
    %402 = vmatprep.subr.mxu0 0.0
    %403 = vmatpush1.msra.mxu0 0.0
    %404 = vmatprep.subr.mxu0 0.0
    %405 = vmatpush1.msra.mxu0 0.0
    %406 = vmatprep.subr.mxu0 0.0
    %407 = vmatpush1.msra.mxu0 0.0
    %408 = vmatprep.subr.mxu0 0.0
    %409 = vmatpush1.msra.mxu0 0.0
    %410 = vmatprep.subr.mxu0 0.0
    %411 = vmatpush1.msra.mxu0 0.0
    %412 = vmatprep.mubr.f32.mxu0 0.0
    %413 = vmatmul.mubr.f32.gmra.mrb[0].mxu0 %v346
    %v414 = vpop.f32.mrb[0].mxu0
    %v415 = vadd.f32 0.0, %v414
    %v416 = vpop.f32.mrb[0].mxu0
    %417 = vdwg.mxu0
    %v418 = vadd.f32 %v345, %v415
    %v419 = vxor.u32 %v418, 2147483648
    %v420 = vmul.f32 %v419, 1.442695
    %v421 = vpow.pop %v420
    %v422 = vadd.f32 %v421, 1.0
    %v423 = vrcp.pop %v422
    %v424 = vmul.f32 1.0, %v423
    %v425 = vtanh.pop %v418
    %v426 = vmul.f32 %v424, %v333
    %428 = vrot.lane.b32.xlu0 %v425, 64
    %v429 = vpop.permute.xlu0 %428
    %v431 = vmul.f32 %v424, %v429
    %433 = vrot.lane.b32.xlu0 %v431, 32
    %v434 = vpop.permute.xlu0 %433
    %v436 = vadd.f32 %v426, %v434
    %v437 = vtanh.pop %v436
    %439 = vrot.lane.b32.xlu0 %v437, 64
    %v440 = vpop.permute.xlu0 %439
    %v442 = vmul.f32 %v424, %v440
    %444 = vrot.lane.b32.xlu0 %v442, 32
    %v445 = vpop.permute.xlu0 %444
    %447 = vst.msk [vmem:[#allocation3 + $0x4] sm:$0x3] %vm240, %v445
    %v448 = vld [vmem:[#allocation2 + $0x6] sm:$0x3]
    %v449 = vsel %vm137, %v445, 0
    %451 = vmatprep.subr.mxu0 0.0
    %452 = vmatpush1.msra.mxu0 %v39
    %453 = vmatprep.subr.mxu0 0.0
    %454 = vmatpush1.msra.mxu0 %v40
    %455 = vmatprep.subr.mxu0 0.0
    %456 = vmatpush1.msra.mxu0 %v41
    %457 = vmatprep.subr.mxu0 0.0
    %458 = vmatpush1.msra.mxu0 %v42
    %459 = vmatprep.subr.mxu0 0.0
    %460 = vmatpush1.msra.mxu0 0.0
    %461 = vmatprep.subr.mxu0 0.0
    %462 = vmatpush1.msra.mxu0 0.0
    %463 = vmatprep.subr.mxu0 0.0
    %464 = vmatpush1.msra.mxu0 0.0
    %465 = vmatprep.subr.mxu0 0.0
    %466 = vmatpush1.msra.mxu0 0.0
    %467 = vmatprep.subr.mxu0 0.0
    %468 = vmatpush1.msra.mxu0 0.0
    %469 = vmatprep.subr.mxu0 0.0
    %470 = vmatpush1.msra.mxu0 0.0
    %471 = vmatprep.subr.mxu0 0.0
    %472 = vmatpush1.msra.mxu0 0.0
    %473 = vmatprep.subr.mxu0 0.0
    %474 = vmatpush1.msra.mxu0 0.0
    %475 = vmatprep.subr.mxu0 0.0
    %476 = vmatpush1.msra.mxu0 0.0
    %477 = vmatprep.subr.mxu0 0.0
    %478 = vmatpush1.msra.mxu0 0.0
    %479 = vmatprep.subr.mxu0 0.0
    %480 = vmatpush1.msra.mxu0 0.0
    %481 = vmatprep.subr.mxu0 0.0
    %482 = vmatpush1.msra.mxu0 0.0
    %483 = vmatprep.subr.mxu0 0.0
    %484 = vmatpush1.msra.mxu0 0.0
    %485 = vmatprep.subr.mxu0 0.0
    %486 = vmatpush1.msra.mxu0 0.0
    %487 = vmatprep.subr.mxu0 0.0
    %488 = vmatpush1.msra.mxu0 0.0
    %489 = vmatprep.subr.mxu0 0.0
    %490 = vmatpush1.msra.mxu0 0.0
    %491 = vmatprep.subr.mxu0 0.0
    %492 = vmatpush1.msra.mxu0 0.0
    %493 = vmatprep.subr.mxu0 0.0
    %494 = vmatpush1.msra.mxu0 0.0
    %495 = vmatprep.subr.mxu0 0.0
    %496 = vmatpush1.msra.mxu0 0.0
    %497 = vmatprep.subr.mxu0 0.0
    %498 = vmatpush1.msra.mxu0 0.0
    %499 = vmatprep.subr.mxu0 0.0
    %500 = vmatpush1.msra.mxu0 0.0
    %501 = vmatprep.subr.mxu0 0.0
    %502 = vmatpush1.msra.mxu0 0.0
    %503 = vmatprep.subr.mxu0 0.0
    %504 = vmatpush1.msra.mxu0 0.0
    %505 = vmatprep.subr.mxu0 0.0
    %506 = vmatpush1.msra.mxu0 0.0
    %507 = vmatprep.subr.mxu0 0.0
    %508 = vmatpush1.msra.mxu0 0.0
    %509 = vmatprep.subr.mxu0 0.0
    %510 = vmatpush1.msra.mxu0 0.0
    %511 = vmatprep.subr.mxu0 0.0
    %512 = vmatpush1.msra.mxu0 0.0
    %513 = vmatprep.subr.mxu0 0.0
    %514 = vmatpush1.msra.mxu0 0.0
    %515 = vmatprep.mubr.f32.mxu0 0.0
    %516 = vmatmul.mubr.f32.gmra.mrb[0].mxu0 %v449
    %v517 = vpop.f32.mrb[0].mxu0
    %v518 = vadd.f32 0.0, %v517
    %v519 = vpop.f32.mrb[0].mxu0
    %520 = vdwg.mxu0
    %v521 = vadd.f32 %v448, %v518
    %v522 = vxor.u32 %v521, 2147483648
    %v523 = vmul.f32 %v522, 1.442695
    %v524 = vpow.pop %v523
    %v525 = vadd.f32 %v524, 1.0
    %v526 = vrcp.pop %v525
    %v527 = vmul.f32 1.0, %v526
    %v528 = vtanh.pop %v521
    %v529 = vmul.f32 %v527, %v436
    %531 = vrot.lane.b32.xlu0 %v528, 64
    %v532 = vpop.permute.xlu0 %531
    %v534 = vmul.f32 %v527, %v532
    %536 = vrot.lane.b32.xlu0 %v534, 32
    %v537 = vpop.permute.xlu0 %536
    %v539 = vadd.f32 %v529, %v537
    %v540 = vtanh.pop %v539
    %542 = vrot.lane.b32.xlu0 %v540, 64
    %v543 = vpop.permute.xlu0 %542
    %v545 = vmul.f32 %v527, %v543
    %547 = vrot.lane.b32.xlu0 %v545, 32
    %v548 = vpop.permute.xlu0 %547
    %550 = vst.msk [vmem:[#allocation3 + $0x6] sm:$0x3] %vm240, %v548
    %v551 = vld [vmem:[#allocation2 + $0x8] sm:$0x3]
    %v552 = vsel %vm137, %v548, 0
    %554 = vmatprep.subr.mxu0 0.0
    %555 = vmatpush1.msra.mxu0 %v39
    %556 = vmatprep.subr.mxu0 0.0
    %557 = vmatpush1.msra.mxu0 %v40
    %558 = vmatprep.subr.mxu0 0.0
    %559 = vmatpush1.msra.mxu0 %v41
    %560 = vmatprep.subr.mxu0 0.0
    %561 = vmatpush1.msra.mxu0 %v42
    %562 = vmatprep.subr.mxu0 0.0
    %563 = vmatpush1.msra.mxu0 0.0
    %564 = vmatprep.subr.mxu0 0.0
    %565 = vmatpush1.msra.mxu0 0.0
    %566 = vmatprep.subr.mxu0 0.0
    %567 = vmatpush1.msra.mxu0 0.0
    %568 = vmatprep.subr.mxu0 0.0
    %569 = vmatpush1.msra.mxu0 0.0
    %570 = vmatprep.subr.mxu0 0.0
    %571 = vmatpush1.msra.mxu0 0.0
    %572 = vmatprep.subr.mxu0 0.0
    %573 = vmatpush1.msra.mxu0 0.0
    %574 = vmatprep.subr.mxu0 0.0
    %575 = vmatpush1.msra.mxu0 0.0
    %576 = vmatprep.subr.mxu0 0.0
    %577 = vmatpush1.msra.mxu0 0.0
    %578 = vmatprep.subr.mxu0 0.0
    %579 = vmatpush1.msra.mxu0 0.0
    %580 = vmatprep.subr.mxu0 0.0
    %581 = vmatpush1.msra.mxu0 0.0
    %582 = vmatprep.subr.mxu0 0.0
    %583 = vmatpush1.msra.mxu0 0.0
    %584 = vmatprep.subr.mxu0 0.0
    %585 = vmatpush1.msra.mxu0 0.0
    %586 = vmatprep.subr.mxu0 0.0
    %587 = vmatpush1.msra.mxu0 0.0
    %588 = vmatprep.subr.mxu0 0.0
    %589 = vmatpush1.msra.mxu0 0.0
    %590 = vmatprep.subr.mxu0 0.0
    %591 = vmatpush1.msra.mxu0 0.0
    %592 = vmatprep.subr.mxu0 0.0
    %593 = vmatpush1.msra.mxu0 0.0
    %594 = vmatprep.subr.mxu0 0.0
    %595 = vmatpush1.msra.mxu0 0.0
    %596 = vmatprep.subr.mxu0 0.0
    %597 = vmatpush1.msra.mxu0 0.0
    %598 = vmatprep.subr.mxu0 0.0
    %599 = vmatpush1.msra.mxu0 0.0
    %600 = vmatprep.subr.mxu0 0.0
    %601 = vmatpush1.msra.mxu0 0.0
    %602 = vmatprep.subr.mxu0 0.0
    %603 = vmatpush1.msra.mxu0 0.0
    %604 = vmatprep.subr.mxu0 0.0
    %605 = vmatpush1.msra.mxu0 0.0
    %606 = vmatprep.subr.mxu0 0.0
    %607 = vmatpush1.msra.mxu0 0.0
    %608 = vmatprep.subr.mxu0 0.0
    %609 = vmatpush1.msra.mxu0 0.0
    %610 = vmatprep.subr.mxu0 0.0
    %611 = vmatpush1.msra.mxu0 0.0
    %612 = vmatprep.subr.mxu0 0.0
    %613 = vmatpush1.msra.mxu0 0.0
    %614 = vmatprep.subr.mxu0 0.0
    %615 = vmatpush1.msra.mxu0 0.0
    %616 = vmatprep.subr.mxu0 0.0
    %617 = vmatpush1.msra.mxu0 0.0
    %618 = vmatprep.mubr.f32.mxu0 0.0
    %619 = vmatmul.mubr.f32.gmra.mrb[0].mxu0 %v552
    %v620 = vpop.f32.mrb[0].mxu0
    %v621 = vadd.f32 0.0, %v620
    %v622 = vpop.f32.mrb[0].mxu0
    %623 = vdwg.mxu0
    %v624 = vadd.f32 %v551, %v621
    %v625 = vxor.u32 %v624, 2147483648
    %v626 = vmul.f32 %v625, 1.442695
    %v627 = vpow.pop %v626
    %v628 = vadd.f32 %v627, 1.0
    %v629 = vrcp.pop %v628
    %v630 = vmul.f32 1.0, %v629
    %v631 = vtanh.pop %v624
    %v632 = vmul.f32 %v630, %v539
    %634 = vrot.lane.b32.xlu0 %v631, 64
    %v635 = vpop.permute.xlu0 %634
    %v637 = vmul.f32 %v630, %v635
    %639 = vrot.lane.b32.xlu0 %v637, 32
    %v640 = vpop.permute.xlu0 %639
    %v642 = vadd.f32 %v632, %v640
    %v643 = vtanh.pop %v642
    %645 = vrot.lane.b32.xlu0 %v643, 64
    %v646 = vpop.permute.xlu0 %645
    %v648 = vmul.f32 %v630, %v646
    %650 = vrot.lane.b32.xlu0 %v648, 32
    %v651 = vpop.permute.xlu0 %650
    %653 = vst.msk [vmem:[#allocation3 + $0x8] sm:$0x3] %vm240, %v651
    %v654 = vld [vmem:[#allocation2 + $0xa] sm:$0x3]
    %v655 = vsel %vm137, %v651, 0
    %657 = vmatprep.subr.mxu0 0.0
    %658 = vmatpush1.msra.mxu0 %v39
    %659 = vmatprep.subr.mxu0 0.0
    %660 = vmatpush1.msra.mxu0 %v40
    %661 = vmatprep.subr.mxu0 0.0
    %662 = vmatpush1.msra.mxu0 %v41
    %663 = vmatprep.subr.mxu0 0.0
    %664 = vmatpush1.msra.mxu0 %v42
    %665 = vmatprep.subr.mxu0 0.0
    %666 = vmatpush1.msra.mxu0 0.0
    %667 = vmatprep.subr.mxu0 0.0
    %668 = vmatpush1.msra.mxu0 0.0
    %669 = vmatprep.subr.mxu0 0.0
    %670 = vmatpush1.msra.mxu0 0.0
    %671 = vmatprep.subr.mxu0 0.0
    %672 = vmatpush1.msra.mxu0 0.0
    %673 = vmatprep.subr.mxu0 0.0
    %674 = vmatpush1.msra.mxu0 0.0
    %675 = vmatprep.subr.mxu0 0.0
    %676 = vmatpush1.msra.mxu0 0.0
    %677 = vmatprep.subr.mxu0 0.0
    %678 = vmatpush1.msra.mxu0 0.0
    %679 = vmatprep.subr.mxu0 0.0
    %680 = vmatpush1.msra.mxu0 0.0
    %681 = vmatprep.subr.mxu0 0.0
    %682 = vmatpush1.msra.mxu0 0.0
    %683 = vmatprep.subr.mxu0 0.0
    %684 = vmatpush1.msra.mxu0 0.0
    %685 = vmatprep.subr.mxu0 0.0
    %686 = vmatpush1.msra.mxu0 0.0
    %687 = vmatprep.subr.mxu0 0.0
    %688 = vmatpush1.msra.mxu0 0.0
    %689 = vmatprep.subr.mxu0 0.0
    %690 = vmatpush1.msra.mxu0 0.0
    %691 = vmatprep.subr.mxu0 0.0
    %692 = vmatpush1.msra.mxu0 0.0
    %693 = vmatprep.subr.mxu0 0.0
    %694 = vmatpush1.msra.mxu0 0.0
    %695 = vmatprep.subr.mxu0 0.0
    %696 = vmatpush1.msra.mxu0 0.0
    %697 = vmatprep.subr.mxu0 0.0
    %698 = vmatpush1.msra.mxu0 0.0
    %699 = vmatprep.subr.mxu0 0.0
    %700 = vmatpush1.msra.mxu0 0.0
    %701 = vmatprep.subr.mxu0 0.0
    %702 = vmatpush1.msra.mxu0 0.0
    %703 = vmatprep.subr.mxu0 0.0
    %704 = vmatpush1.msra.mxu0 0.0
    %705 = vmatprep.subr.mxu0 0.0
    %706 = vmatpush1.msra.mxu0 0.0
    %707 = vmatprep.subr.mxu0 0.0
    %708 = vmatpush1.msra.mxu0 0.0
    %709 = vmatprep.subr.mxu0 0.0
    %710 = vmatpush1.msra.mxu0 0.0
    %711 = vmatprep.subr.mxu0 0.0
    %712 = vmatpush1.msra.mxu0 0.0
    %713 = vmatprep.subr.mxu0 0.0
    %714 = vmatpush1.msra.mxu0 0.0
    %715 = vmatprep.subr.mxu0 0.0
    %716 = vmatpush1.msra.mxu0 0.0
    %717 = vmatprep.subr.mxu0 0.0
    %718 = vmatpush1.msra.mxu0 0.0
    %719 = vmatprep.subr.mxu0 0.0
    %720 = vmatpush1.msra.mxu0 0.0
    %721 = vmatprep.mubr.f32.mxu0 0.0
    %722 = vmatmul.mubr.f32.gmra.mrb[0].mxu0 %v655
    %v723 = vpop.f32.mrb[0].mxu0
    %v724 = vadd.f32 0.0, %v723
    %v725 = vpop.f32.mrb[0].mxu0
    %726 = vdwg.mxu0
    %v727 = vadd.f32 %v654, %v724
    %v728 = vxor.u32 %v727, 2147483648
    %v729 = vmul.f32 %v728, 1.442695
    %v730 = vpow.pop %v729
    %v731 = vadd.f32 %v730, 1.0
    %v732 = vrcp.pop %v731
    %v733 = vmul.f32 1.0, %v732
    %v734 = vtanh.pop %v727
    %v735 = vmul.f32 %v733, %v642
    %737 = vrot.lane.b32.xlu0 %v734, 64
    %v738 = vpop.permute.xlu0 %737
    %v740 = vmul.f32 %v733, %v738
    %742 = vrot.lane.b32.xlu0 %v740, 32
    %v743 = vpop.permute.xlu0 %742
    %v745 = vadd.f32 %v735, %v743
    %v746 = vtanh.pop %v745
    %748 = vrot.lane.b32.xlu0 %v746, 64
    %v749 = vpop.permute.xlu0 %748
    %v751 = vmul.f32 %v733, %v749
    %753 = vrot.lane.b32.xlu0 %v751, 32
    %v754 = vpop.permute.xlu0 %753
    %756 = vst.msk [vmem:[#allocation3 + $0xa] sm:$0x3] %vm240, %v754
    %v757 = vld [vmem:[#allocation2 + $0xc] sm:$0x3]
    %v758 = vsel %vm137, %v754, 0
    %760 = vmatprep.subr.mxu0 0.0
    %761 = vmatpush1.msra.mxu0 %v39
    %762 = vmatprep.subr.mxu0 0.0
    %763 = vmatpush1.msra.mxu0 %v40
    %764 = vmatprep.subr.mxu0 0.0
    %765 = vmatpush1.msra.mxu0 %v41
    %766 = vmatprep.subr.mxu0 0.0
    %767 = vmatpush1.msra.mxu0 %v42
    %768 = vmatprep.subr.mxu0 0.0
    %769 = vmatpush1.msra.mxu0 0.0
    %770 = vmatprep.subr.mxu0 0.0
    %771 = vmatpush1.msra.mxu0 0.0
    %772 = vmatprep.subr.mxu0 0.0
    %773 = vmatpush1.msra.mxu0 0.0
    %774 = vmatprep.subr.mxu0 0.0
    %775 = vmatpush1.msra.mxu0 0.0
    %776 = vmatprep.subr.mxu0 0.0
    %777 = vmatpush1.msra.mxu0 0.0
    %778 = vmatprep.subr.mxu0 0.0
    %779 = vmatpush1.msra.mxu0 0.0
    %780 = vmatprep.subr.mxu0 0.0
    %781 = vmatpush1.msra.mxu0 0.0
    %782 = vmatprep.subr.mxu0 0.0
    %783 = vmatpush1.msra.mxu0 0.0
    %784 = vmatprep.subr.mxu0 0.0
    %785 = vmatpush1.msra.mxu0 0.0
    %786 = vmatprep.subr.mxu0 0.0
    %787 = vmatpush1.msra.mxu0 0.0
    %788 = vmatprep.subr.mxu0 0.0
    %789 = vmatpush1.msra.mxu0 0.0
    %790 = vmatprep.subr.mxu0 0.0
    %791 = vmatpush1.msra.mxu0 0.0
    %792 = vmatprep.subr.mxu0 0.0
    %793 = vmatpush1.msra.mxu0 0.0
    %794 = vmatprep.subr.mxu0 0.0
    %795 = vmatpush1.msra.mxu0 0.0
    %796 = vmatprep.subr.mxu0 0.0
    %797 = vmatpush1.msra.mxu0 0.0
    %798 = vmatprep.subr.mxu0 0.0
    %799 = vmatpush1.msra.mxu0 0.0
    %800 = vmatprep.subr.mxu0 0.0
    %801 = vmatpush1.msra.mxu0 0.0
    %802 = vmatprep.subr.mxu0 0.0
    %803 = vmatpush1.msra.mxu0 0.0
    %804 = vmatprep.subr.mxu0 0.0
    %805 = vmatpush1.msra.mxu0 0.0
    %806 = vmatprep.subr.mxu0 0.0
    %807 = vmatpush1.msra.mxu0 0.0
    %808 = vmatprep.subr.mxu0 0.0
    %809 = vmatpush1.msra.mxu0 0.0
    %810 = vmatprep.subr.mxu0 0.0
    %811 = vmatpush1.msra.mxu0 0.0
    %812 = vmatprep.subr.mxu0 0.0
    %813 = vmatpush1.msra.mxu0 0.0
    %814 = vmatprep.subr.mxu0 0.0
    %815 = vmatpush1.msra.mxu0 0.0
    %816 = vmatprep.subr.mxu0 0.0
    %817 = vmatpush1.msra.mxu0 0.0
    %818 = vmatprep.subr.mxu0 0.0
    %819 = vmatpush1.msra.mxu0 0.0
    %820 = vmatprep.subr.mxu0 0.0
    %821 = vmatpush1.msra.mxu0 0.0
    %822 = vmatprep.subr.mxu0 0.0
    %823 = vmatpush1.msra.mxu0 0.0
    %824 = vmatprep.mubr.f32.mxu0 0.0
    %825 = vmatmul.mubr.f32.gmra.mrb[0].mxu0 %v758
    %v826 = vpop.f32.mrb[0].mxu0
    %v827 = vadd.f32 0.0, %v826
    %v828 = vpop.f32.mrb[0].mxu0
    %829 = vdwg.mxu0
    %v830 = vadd.f32 %v757, %v827
    %v831 = vxor.u32 %v830, 2147483648
    %v832 = vmul.f32 %v831, 1.442695
    %v833 = vpow.pop %v832
    %v834 = vadd.f32 %v833, 1.0
    %v835 = vrcp.pop %v834
    %v836 = vmul.f32 1.0, %v835
    %v837 = vtanh.pop %v830
    %v838 = vmul.f32 %v836, %v745
    %840 = vrot.lane.b32.xlu0 %v837, 64
    %v841 = vpop.permute.xlu0 %840
    %v843 = vmul.f32 %v836, %v841
    %845 = vrot.lane.b32.xlu0 %v843, 32
    %v846 = vpop.permute.xlu0 %845
    %v848 = vadd.f32 %v838, %v846
    %v849 = vtanh.pop %v848
    %851 = vrot.lane.b32.xlu0 %v849, 64
    %v852 = vpop.permute.xlu0 %851
    %v854 = vmul.f32 %v836, %v852
    %856 = vrot.lane.b32.xlu0 %v854, 32
    %v857 = vpop.permute.xlu0 %856
    %859 = vst.msk [vmem:[#allocation3 + $0xc] sm:$0x3] %vm240, %v857
    %v860 = vld [vmem:[#allocation2 + $0xe] sm:$0x3]
    %v861 = vsel %vm137, %v857, 0
    %863 = vmatprep.subr.mxu0 0.0
    %864 = vmatpush1.msra.mxu0 %v39
    %865 = vmatprep.subr.mxu0 0.0
    %866 = vmatpush1.msra.mxu0 %v40
    %867 = vmatprep.subr.mxu0 0.0
    %868 = vmatpush1.msra.mxu0 %v41
    %869 = vmatprep.subr.mxu0 0.0
    %870 = vmatpush1.msra.mxu0 %v42
    %871 = vmatprep.subr.mxu0 0.0
    %872 = vmatpush1.msra.mxu0 0.0
    %873 = vmatprep.subr.mxu0 0.0
    %874 = vmatpush1.msra.mxu0 0.0
    %875 = vmatprep.subr.mxu0 0.0
    %876 = vmatpush1.msra.mxu0 0.0
    %877 = vmatprep.subr.mxu0 0.0
    %878 = vmatpush1.msra.mxu0 0.0
    %879 = vmatprep.subr.mxu0 0.0
    %880 = vmatpush1.msra.mxu0 0.0
    %881 = vmatprep.subr.mxu0 0.0
    %882 = vmatpush1.msra.mxu0 0.0
    %883 = vmatprep.subr.mxu0 0.0
    %884 = vmatpush1.msra.mxu0 0.0
    %885 = vmatprep.subr.mxu0 0.0
    %886 = vmatpush1.msra.mxu0 0.0
    %887 = vmatprep.subr.mxu0 0.0
    %888 = vmatpush1.msra.mxu0 0.0
    %889 = vmatprep.subr.mxu0 0.0
    %890 = vmatpush1.msra.mxu0 0.0
    %891 = vmatprep.subr.mxu0 0.0
    %892 = vmatpush1.msra.mxu0 0.0
    %893 = vmatprep.subr.mxu0 0.0
    %894 = vmatpush1.msra.mxu0 0.0
    %895 = vmatprep.subr.mxu0 0.0
    %896 = vmatpush1.msra.mxu0 0.0
    %897 = vmatprep.subr.mxu0 0.0
    %898 = vmatpush1.msra.mxu0 0.0
    %899 = vmatprep.subr.mxu0 0.0
    %900 = vmatpush1.msra.mxu0 0.0
    %901 = vmatprep.subr.mxu0 0.0
    %902 = vmatpush1.msra.mxu0 0.0
    %903 = vmatprep.subr.mxu0 0.0
    %904 = vmatpush1.msra.mxu0 0.0
    %905 = vmatprep.subr.mxu0 0.0
    %906 = vmatpush1.msra.mxu0 0.0
    %907 = vmatprep.subr.mxu0 0.0
    %908 = vmatpush1.msra.mxu0 0.0
    %909 = vmatprep.subr.mxu0 0.0
    %910 = vmatpush1.msra.mxu0 0.0
    %911 = vmatprep.subr.mxu0 0.0
    %912 = vmatpush1.msra.mxu0 0.0
    %913 = vmatprep.subr.mxu0 0.0
    %914 = vmatpush1.msra.mxu0 0.0
    %915 = vmatprep.subr.mxu0 0.0
    %916 = vmatpush1.msra.mxu0 0.0
    %917 = vmatprep.subr.mxu0 0.0
    %918 = vmatpush1.msra.mxu0 0.0
    %919 = vmatprep.subr.mxu0 0.0
    %920 = vmatpush1.msra.mxu0 0.0
    %921 = vmatprep.subr.mxu0 0.0
    %922 = vmatpush1.msra.mxu0 0.0
    %923 = vmatprep.subr.mxu0 0.0
    %924 = vmatpush1.msra.mxu0 0.0
    %925 = vmatprep.subr.mxu0 0.0
    %926 = vmatpush1.msra.mxu0 0.0
    %927 = vmatprep.mubr.f32.mxu0 0.0
    %928 = vmatmul.mubr.f32.gmra.mrb[0].mxu0 %v861
    %v929 = vpop.f32.mrb[0].mxu0
    %v930 = vadd.f32 0.0, %v929
    %v931 = vpop.f32.mrb[0].mxu0
    %932 = vdwg.mxu0
    %v933 = vadd.f32 %v860, %v930
    %v934 = vxor.u32 %v933, 2147483648
    %v935 = vmul.f32 %v934, 1.442695
    %v936 = vpow.pop %v935
    %v937 = vadd.f32 %v936, 1.0
    %v938 = vrcp.pop %v937
    %v939 = vmul.f32 1.0, %v938
    %v940 = vtanh.pop %v933
    %v941 = vmul.f32 %v939, %v848
    %943 = vrot.lane.b32.xlu0 %v940, 64
    %v944 = vpop.permute.xlu0 %943
    %v946 = vmul.f32 %v939, %v944
    %948 = vrot.lane.b32.xlu0 %v946, 32
    %v949 = vpop.permute.xlu0 %948
    %v951 = vadd.f32 %v941, %v949
    %v952 = vtanh.pop %v951
    %954 = vrot.lane.b32.xlu0 %v952, 64
    %v955 = vpop.permute.xlu0 %954
    %v957 = vmul.f32 %v939, %v955
    %959 = vrot.lane.b32.xlu0 %v957, 32
    %v960 = vpop.permute.xlu0 %959
    %962 = vst.msk [vmem:[#allocation3 + $0xe] sm:$0x3] %vm240, %v960
    %963 = vst.msk [vmem:[#allocation6] sm:$0x3] %vm240, %v960
    %965 = vrot.lane.b32.xlu0 %v951, 96
    %v966 = vpop.permute.xlu0 %965
    %968 = vst.msk [vmem:[#allocation8] sm:$0x3] %vm240, %v966
    %v969 = vld [vmem:[%s4] sm:$0xff]
    %v970 = vld [vmem:[%s4 + $0x8] sm:$0xff]
    %v971 = vld [vmem:[%s4 + $0x10] sm:$0xff]
    %v972 = vld [vmem:[%s4 + $0x18] sm:$0xff]
    %v973 = vld [vmem:[%s5] sm:$0xff]
    %v974 = vld [vmem:[%s5 + $0x8] sm:$0xff]
    %v975 = vld [vmem:[%s5 + $0x10] sm:$0xff]
    %v976 = vld [vmem:[%s5 + $0x18] sm:$0xff]
    %v977 = vld [vmem:[%s6] sm:$0x1]
    %v978 = vld [vmem:[#allocation3] sm:$0xff]
    %v979 = vld [vmem:[#allocation3 + $0x8] sm:$0xff]
    %v981 = vlaneseq
    %v982 = vshrl.u32 %v981, 7
    %v983 = vsub.s32 0, %v982
    %v984 = vrot.slane %v977, %v983
    %v987 = vsel %vm137, %v978, 0
    %v990 = vsel %vm137, %v979, 0
    %992 = vmatprep.subr.mxu0 0.0
    %993 = vmatpush1.msra.mxu0 %v969
    %994 = vmatprep.subr.mxu0 0.0
    %995 = vmatpush1.msra.mxu0 %v970
    %996 = vmatprep.subr.mxu0 0.0
    %997 = vmatpush1.msra.mxu0 %v971
    %998 = vmatprep.subr.mxu0 0.0
    %999 = vmatpush1.msra.mxu0 %v972
    %1000 = vmatprep.subr.mxu0 0.0
    %1001 = vmatpush1.msra.mxu0 0.0
    %1002 = vmatprep.subr.mxu0 0.0
    %1003 = vmatpush1.msra.mxu0 0.0
    %1004 = vmatprep.subr.mxu0 0.0
    %1005 = vmatpush1.msra.mxu0 0.0
    %1006 = vmatprep.subr.mxu0 0.0
    %1007 = vmatpush1.msra.mxu0 0.0
    %1008 = vmatprep.subr.mxu0 0.0
    %1009 = vmatpush1.msra.mxu0 0.0
    %1010 = vmatprep.subr.mxu0 0.0
    %1011 = vmatpush1.msra.mxu0 0.0
    %1012 = vmatprep.subr.mxu0 0.0
    %1013 = vmatpush1.msra.mxu0 0.0
    %1014 = vmatprep.subr.mxu0 0.0
    %1015 = vmatpush1.msra.mxu0 0.0
    %1016 = vmatprep.subr.mxu0 0.0
    %1017 = vmatpush1.msra.mxu0 0.0
    %1018 = vmatprep.subr.mxu0 0.0
    %1019 = vmatpush1.msra.mxu0 0.0
    %1020 = vmatprep.subr.mxu0 0.0
    %1021 = vmatpush1.msra.mxu0 0.0
    %1022 = vmatprep.subr.mxu0 0.0
    %1023 = vmatpush1.msra.mxu0 0.0
    %1024 = vmatprep.subr.mxu0 0.0
    %1025 = vmatpush1.msra.mxu0 0.0
    %1026 = vmatprep.subr.mxu0 0.0
    %1027 = vmatpush1.msra.mxu0 0.0
    %1028 = vmatprep.subr.mxu0 0.0
    %1029 = vmatpush1.msra.mxu0 0.0
    %1030 = vmatprep.subr.mxu0 0.0
    %1031 = vmatpush1.msra.mxu0 0.0
    %1032 = vmatprep.subr.mxu0 0.0
    %1033 = vmatpush1.msra.mxu0 0.0
    %1034 = vmatprep.subr.mxu0 0.0
    %1035 = vmatpush1.msra.mxu0 0.0
    %1036 = vmatprep.subr.mxu0 0.0
    %1037 = vmatpush1.msra.mxu0 0.0
    %1038 = vmatprep.subr.mxu0 0.0
    %1039 = vmatpush1.msra.mxu0 0.0
    %1040 = vmatprep.subr.mxu0 0.0
    %1041 = vmatpush1.msra.mxu0 0.0
    %1042 = vmatprep.subr.mxu0 0.0
    %1043 = vmatpush1.msra.mxu0 0.0
    %1044 = vmatprep.subr.mxu0 0.0
    %1045 = vmatpush1.msra.mxu0 0.0
    %1046 = vmatprep.subr.mxu0 0.0
    %1047 = vmatpush1.msra.mxu0 0.0
    %1048 = vmatprep.subr.mxu0 0.0
    %1049 = vmatpush1.msra.mxu0 0.0
    %1050 = vmatprep.subr.mxu0 0.0
    %1051 = vmatpush1.msra.mxu0 0.0
    %1052 = vmatprep.subr.mxu0 0.0
    %1053 = vmatpush1.msra.mxu0 0.0
    %1054 = vmatprep.subr.mxu0 0.0
    %1055 = vmatpush1.msra.mxu0 0.0
    %1056 = vmatprep.mubr.f32.mxu0 0.0
    %1057 = vmatmul.mubr.f32.gmra.mrb[0].mxu0 %v987
    %v1058 = vpop.f32.mrb[0].mxu0
    %v1059 = vadd.f32 %v984, %v1058
    %v1060 = vpop.f32.mrb[0].mxu0
    %1061 = vmatprep.mubr.f32.mxu0 0.0
    %1062 = vmatmul.mubr.f32.gmra.mrb[0].mxu0 %v990
    %v1063 = vpop.f32.mrb[0].mxu0
    %v1064 = vadd.f32 %v984, %v1063
    %v1065 = vpop.f32.mrb[0].mxu0
    %1066 = vdwg.mxu0
    %1067 = vst [vmem:[#allocation2] sm:$0xff] %v1059
    %1068 = vst [vmem:[#allocation2 + $0x8] sm:$0xff] %v1064
    %v1069 = vld [vmem:[#allocation2] sm:$0x3]
    %1070 = vmatprep.subr.mxu0 0.0
    %1071 = vmatpush1.msra.mxu0 %v973
    %1072 = vmatprep.subr.mxu0 0.0
    %1073 = vmatpush1.msra.mxu0 %v974
    %1074 = vmatprep.subr.mxu0 0.0
    %1075 = vmatpush1.msra.mxu0 %v975
    %1076 = vmatprep.subr.mxu0 0.0
    %1077 = vmatpush1.msra.mxu0 %v976
    %1078 = vmatprep.subr.mxu0 0.0
    %1079 = vmatpush1.msra.mxu0 0.0
    %1080 = vmatprep.subr.mxu0 0.0
    %1081 = vmatpush1.msra.mxu0 0.0
    %1082 = vmatprep.subr.mxu0 0.0
    %1083 = vmatpush1.msra.mxu0 0.0
    %1084 = vmatprep.subr.mxu0 0.0
    %1085 = vmatpush1.msra.mxu0 0.0
    %1086 = vmatprep.subr.mxu0 0.0
    %1087 = vmatpush1.msra.mxu0 0.0
    %1088 = vmatprep.subr.mxu0 0.0
    %1089 = vmatpush1.msra.mxu0 0.0
    %1090 = vmatprep.subr.mxu0 0.0
    %1091 = vmatpush1.msra.mxu0 0.0
    %1092 = vmatprep.subr.mxu0 0.0
    %1093 = vmatpush1.msra.mxu0 0.0
    %1094 = vmatprep.subr.mxu0 0.0
    %1095 = vmatpush1.msra.mxu0 0.0
    %1096 = vmatprep.subr.mxu0 0.0
    %1097 = vmatpush1.msra.mxu0 0.0
    %1098 = vmatprep.subr.mxu0 0.0
    %1099 = vmatpush1.msra.mxu0 0.0
    %1100 = vmatprep.subr.mxu0 0.0
    %1101 = vmatpush1.msra.mxu0 0.0
    %1102 = vmatprep.subr.mxu0 0.0
    %1103 = vmatpush1.msra.mxu0 0.0
    %1104 = vmatprep.subr.mxu0 0.0
    %1105 = vmatpush1.msra.mxu0 0.0
    %1106 = vmatprep.subr.mxu0 0.0
    %1107 = vmatpush1.msra.mxu0 0.0
    %1108 = vmatprep.subr.mxu0 0.0
    %1109 = vmatpush1.msra.mxu0 0.0
    %1110 = vmatprep.subr.mxu0 0.0
    %1111 = vmatpush1.msra.mxu0 0.0
    %1112 = vmatprep.subr.mxu0 0.0
    %1113 = vmatpush1.msra.mxu0 0.0
    %1114 = vmatprep.subr.mxu0 0.0
    %1115 = vmatpush1.msra.mxu0 0.0
    %1116 = vmatprep.subr.mxu0 0.0
    %1117 = vmatpush1.msra.mxu0 0.0
    %1118 = vmatprep.subr.mxu0 0.0
    %1119 = vmatpush1.msra.mxu0 0.0
    %1120 = vmatprep.subr.mxu0 0.0
    %1121 = vmatpush1.msra.mxu0 0.0
    %1122 = vmatprep.subr.mxu0 0.0
    %1123 = vmatpush1.msra.mxu0 0.0
    %1124 = vmatprep.subr.mxu0 0.0
    %1125 = vmatpush1.msra.mxu0 0.0
    %1126 = vmatprep.subr.mxu0 0.0
    %1127 = vmatpush1.msra.mxu0 0.0
    %1128 = vmatprep.subr.mxu0 0.0
    %1129 = vmatpush1.msra.mxu0 0.0
    %1130 = vmatprep.subr.mxu0 0.0
    %1131 = vmatpush1.msra.mxu0 0.0
    %1132 = vmatprep.subr.mxu0 0.0
    %1133 = vmatpush1.msra.mxu0 0.0
    %1134 = vmatprep.mubr.f32.mxu0 0.0
    %1135 = vmatmul.mubr.f32.gmra.mrb[0].mxu0 %v139
    %v1136 = vpop.f32.mrb[0].mxu0
    %v1137 = vadd.f32 0.0, %v1136
    %v1138 = vpop.f32.mrb[0].mxu0
    %1139 = vdwg.mxu0
    %v1140 = vadd.f32 %v1069, %v1137
    %v1141 = vxor.u32 %v1140, 2147483648
    %v1142 = vmul.f32 %v1141, 1.442695
    %v1143 = vpow.pop %v1142
    %v1144 = vadd.f32 %v1143, 1.0
    %v1145 = vrcp.pop %v1144
    %v1146 = vmul.f32 1.0, %v1145
    %v1147 = vtanh.pop %v1140
    %v1148 = vmul.f32 %v1146, 0.0
    %1150 = vrot.lane.b32.xlu0 %v1147, 64
    %v1151 = vpop.permute.xlu0 %1150
    %v1153 = vmul.f32 %v1146, %v1151
    %1155 = vrot.lane.b32.xlu0 %v1153, 32
    %v1156 = vpop.permute.xlu0 %1155
    %v1158 = vadd.f32 %v1148, %v1156
    %v1159 = vtanh.pop %v1158
    %1161 = vrot.lane.b32.xlu0 %v1159, 64
    %v1162 = vpop.permute.xlu0 %1161
    %v1164 = vmul.f32 %v1146, %v1162
    %v1165 = vld [vmem:[#allocation2 + $0x2] sm:$0x3]
    %1167 = vrot.lane.b32.xlu0 %v1164, 32
    %v1168 = vpop.permute.xlu0 %1167
    %v1169 = vsel %vm137, %v1168, 0
    %1171 = vmatprep.subr.mxu0 0.0
    %1172 = vmatpush1.msra.mxu0 %v973
    %1173 = vmatprep.subr.mxu0 0.0
    %1174 = vmatpush1.msra.mxu0 %v974
    %1175 = vmatprep.subr.mxu0 0.0
    %1176 = vmatpush1.msra.mxu0 %v975
    %1177 = vmatprep.subr.mxu0 0.0
    %1178 = vmatpush1.msra.mxu0 %v976
    %1179 = vmatprep.subr.mxu0 0.0
    %1180 = vmatpush1.msra.mxu0 0.0
    %1181 = vmatprep.subr.mxu0 0.0
    %1182 = vmatpush1.msra.mxu0 0.0
    %1183 = vmatprep.subr.mxu0 0.0
    %1184 = vmatpush1.msra.mxu0 0.0
    %1185 = vmatprep.subr.mxu0 0.0
    %1186 = vmatpush1.msra.mxu0 0.0
    %1187 = vmatprep.subr.mxu0 0.0
    %1188 = vmatpush1.msra.mxu0 0.0
    %1189 = vmatprep.subr.mxu0 0.0
    %1190 = vmatpush1.msra.mxu0 0.0
    %1191 = vmatprep.subr.mxu0 0.0
    %1192 = vmatpush1.msra.mxu0 0.0
    %1193 = vmatprep.subr.mxu0 0.0
    %1194 = vmatpush1.msra.mxu0 0.0
    %1195 = vmatprep.subr.mxu0 0.0
    %1196 = vmatpush1.msra.mxu0 0.0
    %1197 = vmatprep.subr.mxu0 0.0
    %1198 = vmatpush1.msra.mxu0 0.0
    %1199 = vmatprep.subr.mxu0 0.0
    %1200 = vmatpush1.msra.mxu0 0.0
    %1201 = vmatprep.subr.mxu0 0.0
    %1202 = vmatpush1.msra.mxu0 0.0
    %1203 = vmatprep.subr.mxu0 0.0
    %1204 = vmatpush1.msra.mxu0 0.0
    %1205 = vmatprep.subr.mxu0 0.0
    %1206 = vmatpush1.msra.mxu0 0.0
    %1207 = vmatprep.subr.mxu0 0.0
    %1208 = vmatpush1.msra.mxu0 0.0
    %1209 = vmatprep.subr.mxu0 0.0
    %1210 = vmatpush1.msra.mxu0 0.0
    %1211 = vmatprep.subr.mxu0 0.0
    %1212 = vmatpush1.msra.mxu0 0.0
    %1213 = vmatprep.subr.mxu0 0.0
    %1214 = vmatpush1.msra.mxu0 0.0
    %1215 = vmatprep.subr.mxu0 0.0
    %1216 = vmatpush1.msra.mxu0 0.0
    %1217 = vmatprep.subr.mxu0 0.0
    %1218 = vmatpush1.msra.mxu0 0.0
    %1219 = vmatprep.subr.mxu0 0.0
    %1220 = vmatpush1.msra.mxu0 0.0
    %1221 = vmatprep.subr.mxu0 0.0
    %1222 = vmatpush1.msra.mxu0 0.0
    %1223 = vmatprep.subr.mxu0 0.0
    %1224 = vmatpush1.msra.mxu0 0.0
    %1225 = vmatprep.subr.mxu0 0.0
    %1226 = vmatpush1.msra.mxu0 0.0
    %1227 = vmatprep.subr.mxu0 0.0
    %1228 = vmatpush1.msra.mxu0 0.0
    %1229 = vmatprep.subr.mxu0 0.0
    %1230 = vmatpush1.msra.mxu0 0.0
    %1231 = vmatprep.subr.mxu0 0.0
    %1232 = vmatpush1.msra.mxu0 0.0
    %1233 = vmatprep.subr.mxu0 0.0
    %1234 = vmatpush1.msra.mxu0 0.0
    %1235 = vmatprep.mubr.f32.mxu0 0.0
    %1236 = vmatmul.mubr.f32.gmra.mrb[0].mxu0 %v1169
    %v1237 = vpop.f32.mrb[0].mxu0
    %v1238 = vadd.f32 0.0, %v1237
    %v1239 = vpop.f32.mrb[0].mxu0
    %1240 = vdwg.mxu0
    %v1241 = vadd.f32 %v1165, %v1238
    %v1242 = vxor.u32 %v1241, 2147483648
    %v1243 = vmul.f32 %v1242, 1.442695
    %v1244 = vpow.pop %v1243
    %v1245 = vadd.f32 %v1244, 1.0
    %v1246 = vrcp.pop %v1245
    %v1247 = vmul.f32 1.0, %v1246
    %v1248 = vtanh.pop %v1241
    %v1249 = vmul.f32 %v1247, %v1158
    %1251 = vrot.lane.b32.xlu0 %v1248, 64
    %v1252 = vpop.permute.xlu0 %1251
    %v1254 = vmul.f32 %v1247, %v1252
    %1256 = vrot.lane.b32.xlu0 %v1254, 32
    %v1257 = vpop.permute.xlu0 %1256
    %v1259 = vadd.f32 %v1249, %v1257
    %v1260 = vtanh.pop %v1259
    %1262 = vrot.lane.b32.xlu0 %v1260, 64
    %v1263 = vpop.permute.xlu0 %1262
    %v1265 = vmul.f32 %v1247, %v1263
    %v1266 = vld [vmem:[#allocation2 + $0x4] sm:$0x3]
    %1268 = vrot.lane.b32.xlu0 %v1265, 32
    %v1269 = vpop.permute.xlu0 %1268
    %v1270 = vsel %vm137, %v1269, 0
    %1272 = vmatprep.subr.mxu0 0.0
    %1273 = vmatpush1.msra.mxu0 %v973
    %1274 = vmatprep.subr.mxu0 0.0
    %1275 = vmatpush1.msra.mxu0 %v974
    %1276 = vmatprep.subr.mxu0 0.0
    %1277 = vmatpush1.msra.mxu0 %v975
    %1278 = vmatprep.subr.mxu0 0.0
    %1279 = vmatpush1.msra.mxu0 %v976
    %1280 = vmatprep.subr.mxu0 0.0
    %1281 = vmatpush1.msra.mxu0 0.0
    %1282 = vmatprep.subr.mxu0 0.0
    %1283 = vmatpush1.msra.mxu0 0.0
    %1284 = vmatprep.subr.mxu0 0.0
    %1285 = vmatpush1.msra.mxu0 0.0
    %1286 = vmatprep.subr.mxu0 0.0
    %1287 = vmatpush1.msra.mxu0 0.0
    %1288 = vmatprep.subr.mxu0 0.0
    %1289 = vmatpush1.msra.mxu0 0.0
    %1290 = vmatprep.subr.mxu0 0.0
    %1291 = vmatpush1.msra.mxu0 0.0
    %1292 = vmatprep.subr.mxu0 0.0
    %1293 = vmatpush1.msra.mxu0 0.0
    %1294 = vmatprep.subr.mxu0 0.0
    %1295 = vmatpush1.msra.mxu0 0.0
    %1296 = vmatprep.subr.mxu0 0.0
    %1297 = vmatpush1.msra.mxu0 0.0
    %1298 = vmatprep.subr.mxu0 0.0
    %1299 = vmatpush1.msra.mxu0 0.0
    %1300 = vmatprep.subr.mxu0 0.0
    %1301 = vmatpush1.msra.mxu0 0.0
    %1302 = vmatprep.subr.mxu0 0.0
    %1303 = vmatpush1.msra.mxu0 0.0
    %1304 = vmatprep.subr.mxu0 0.0
    %1305 = vmatpush1.msra.mxu0 0.0
    %1306 = vmatprep.subr.mxu0 0.0
    %1307 = vmatpush1.msra.mxu0 0.0
    %1308 = vmatprep.subr.mxu0 0.0
    %1309 = vmatpush1.msra.mxu0 0.0
    %1310 = vmatprep.subr.mxu0 0.0
    %1311 = vmatpush1.msra.mxu0 0.0
    %1312 = vmatprep.subr.mxu0 0.0
    %1313 = vmatpush1.msra.mxu0 0.0
    %1314 = vmatprep.subr.mxu0 0.0
    %1315 = vmatpush1.msra.mxu0 0.0
    %1316 = vmatprep.subr.mxu0 0.0
    %1317 = vmatpush1.msra.mxu0 0.0
    %1318 = vmatprep.subr.mxu0 0.0
    %1319 = vmatpush1.msra.mxu0 0.0
    %1320 = vmatprep.subr.mxu0 0.0
    %1321 = vmatpush1.msra.mxu0 0.0
    %1322 = vmatprep.subr.mxu0 0.0
    %1323 = vmatpush1.msra.mxu0 0.0
    %1324 = vmatprep.subr.mxu0 0.0
    %1325 = vmatpush1.msra.mxu0 0.0
    %1326 = vmatprep.subr.mxu0 0.0
    %1327 = vmatpush1.msra.mxu0 0.0
    %1328 = vmatprep.subr.mxu0 0.0
    %1329 = vmatpush1.msra.mxu0 0.0
    %1330 = vmatprep.subr.mxu0 0.0
    %1331 = vmatpush1.msra.mxu0 0.0
    %1332 = vmatprep.subr.mxu0 0.0
    %1333 = vmatpush1.msra.mxu0 0.0
    %1334 = vmatprep.subr.mxu0 0.0
    %1335 = vmatpush1.msra.mxu0 0.0
    %1336 = vmatprep.mubr.f32.mxu0 0.0
    %1337 = vmatmul.mubr.f32.gmra.mrb[0].mxu0 %v1270
    %v1338 = vpop.f32.mrb[0].mxu0
    %v1339 = vadd.f32 0.0, %v1338
    %v1340 = vpop.f32.mrb[0].mxu0
    %1341 = vdwg.mxu0
    %v1342 = vadd.f32 %v1266, %v1339
    %v1343 = vxor.u32 %v1342, 2147483648
    %v1344 = vmul.f32 %v1343, 1.442695
    %v1345 = vpow.pop %v1344
    %v1346 = vadd.f32 %v1345, 1.0
    %v1347 = vrcp.pop %v1346
    %v1348 = vmul.f32 1.0, %v1347
    %v1349 = vtanh.pop %v1342
    %v1350 = vmul.f32 %v1348, %v1259
    %1352 = vrot.lane.b32.xlu0 %v1349, 64
    %v1353 = vpop.permute.xlu0 %1352
    %v1355 = vmul.f32 %v1348, %v1353
    %1357 = vrot.lane.b32.xlu0 %v1355, 32
    %v1358 = vpop.permute.xlu0 %1357
    %v1360 = vadd.f32 %v1350, %v1358
    %v1361 = vtanh.pop %v1360
    %1363 = vrot.lane.b32.xlu0 %v1361, 64
    %v1364 = vpop.permute.xlu0 %1363
    %v1366 = vmul.f32 %v1348, %v1364
    %v1367 = vld [vmem:[#allocation2 + $0x6] sm:$0x3]
    %1369 = vrot.lane.b32.xlu0 %v1366, 32
    %v1370 = vpop.permute.xlu0 %1369
    %v1371 = vsel %vm137, %v1370, 0
    %1373 = vmatprep.subr.mxu0 0.0
    %1374 = vmatpush1.msra.mxu0 %v973
    %1375 = vmatprep.subr.mxu0 0.0
    %1376 = vmatpush1.msra.mxu0 %v974
    %1377 = vmatprep.subr.mxu0 0.0
    %1378 = vmatpush1.msra.mxu0 %v975
    %1379 = vmatprep.subr.mxu0 0.0
    %1380 = vmatpush1.msra.mxu0 %v976
    %1381 = vmatprep.subr.mxu0 0.0
    %1382 = vmatpush1.msra.mxu0 0.0
    %1383 = vmatprep.subr.mxu0 0.0
    %1384 = vmatpush1.msra.mxu0 0.0
    %1385 = vmatprep.subr.mxu0 0.0
    %1386 = vmatpush1.msra.mxu0 0.0
    %1387 = vmatprep.subr.mxu0 0.0
    %1388 = vmatpush1.msra.mxu0 0.0
    %1389 = vmatprep.subr.mxu0 0.0
    %1390 = vmatpush1.msra.mxu0 0.0
    %1391 = vmatprep.subr.mxu0 0.0
    %1392 = vmatpush1.msra.mxu0 0.0
    %1393 = vmatprep.subr.mxu0 0.0
    %1394 = vmatpush1.msra.mxu0 0.0
    %1395 = vmatprep.subr.mxu0 0.0
    %1396 = vmatpush1.msra.mxu0 0.0
    %1397 = vmatprep.subr.mxu0 0.0
    %1398 = vmatpush1.msra.mxu0 0.0
    %1399 = vmatprep.subr.mxu0 0.0
    %1400 = vmatpush1.msra.mxu0 0.0
    %1401 = vmatprep.subr.mxu0 0.0
    %1402 = vmatpush1.msra.mxu0 0.0
    %1403 = vmatprep.subr.mxu0 0.0
    %1404 = vmatpush1.msra.mxu0 0.0
    %1405 = vmatprep.subr.mxu0 0.0
    %1406 = vmatpush1.msra.mxu0 0.0
    %1407 = vmatprep.subr.mxu0 0.0
    %1408 = vmatpush1.msra.mxu0 0.0
    %1409 = vmatprep.subr.mxu0 0.0
    %1410 = vmatpush1.msra.mxu0 0.0
    %1411 = vmatprep.subr.mxu0 0.0
    %1412 = vmatpush1.msra.mxu0 0.0
    %1413 = vmatprep.subr.mxu0 0.0
    %1414 = vmatpush1.msra.mxu0 0.0
    %1415 = vmatprep.subr.mxu0 0.0
    %1416 = vmatpush1.msra.mxu0 0.0
    %1417 = vmatprep.subr.mxu0 0.0
    %1418 = vmatpush1.msra.mxu0 0.0
    %1419 = vmatprep.subr.mxu0 0.0
    %1420 = vmatpush1.msra.mxu0 0.0
    %1421 = vmatprep.subr.mxu0 0.0
    %1422 = vmatpush1.msra.mxu0 0.0
    %1423 = vmatprep.subr.mxu0 0.0
    %1424 = vmatpush1.msra.mxu0 0.0
    %1425 = vmatprep.subr.mxu0 0.0
    %1426 = vmatpush1.msra.mxu0 0.0
    %1427 = vmatprep.subr.mxu0 0.0
    %1428 = vmatpush1.msra.mxu0 0.0
    %1429 = vmatprep.subr.mxu0 0.0
    %1430 = vmatpush1.msra.mxu0 0.0
    %1431 = vmatprep.subr.mxu0 0.0
    %1432 = vmatpush1.msra.mxu0 0.0
    %1433 = vmatprep.subr.mxu0 0.0
    %1434 = vmatpush1.msra.mxu0 0.0
    %1435 = vmatprep.subr.mxu0 0.0
    %1436 = vmatpush1.msra.mxu0 0.0
    %1437 = vmatprep.mubr.f32.mxu0 0.0
    %1438 = vmatmul.mubr.f32.gmra.mrb[0].mxu0 %v1371
    %v1439 = vpop.f32.mrb[0].mxu0
    %v1440 = vadd.f32 0.0, %v1439
    %v1441 = vpop.f32.mrb[0].mxu0
    %1442 = vdwg.mxu0
    %v1443 = vadd.f32 %v1367, %v1440
    %v1444 = vxor.u32 %v1443, 2147483648
    %v1445 = vmul.f32 %v1444, 1.442695
    %v1446 = vpow.pop %v1445
    %v1447 = vadd.f32 %v1446, 1.0
    %v1448 = vrcp.pop %v1447
    %v1449 = vmul.f32 1.0, %v1448
    %v1450 = vtanh.pop %v1443
    %v1451 = vmul.f32 %v1449, %v1360
    %1453 = vrot.lane.b32.xlu0 %v1450, 64
    %v1454 = vpop.permute.xlu0 %1453
    %v1456 = vmul.f32 %v1449, %v1454
    %1458 = vrot.lane.b32.xlu0 %v1456, 32
    %v1459 = vpop.permute.xlu0 %1458
    %v1461 = vadd.f32 %v1451, %v1459
    %v1462 = vtanh.pop %v1461
    %1464 = vrot.lane.b32.xlu0 %v1462, 64
    %v1465 = vpop.permute.xlu0 %1464
    %v1467 = vmul.f32 %v1449, %v1465
    %v1468 = vld [vmem:[#allocation2 + $0x8] sm:$0x3]
    %1470 = vrot.lane.b32.xlu0 %v1467, 32
    %v1471 = vpop.permute.xlu0 %1470
    %v1472 = vsel %vm137, %v1471, 0
    %1474 = vmatprep.subr.mxu0 0.0
    %1475 = vmatpush1.msra.mxu0 %v973
    %1476 = vmatprep.subr.mxu0 0.0
    %1477 = vmatpush1.msra.mxu0 %v974
    %1478 = vmatprep.subr.mxu0 0.0
    %1479 = vmatpush1.msra.mxu0 %v975
    %1480 = vmatprep.subr.mxu0 0.0
    %1481 = vmatpush1.msra.mxu0 %v976
    %1482 = vmatprep.subr.mxu0 0.0
    %1483 = vmatpush1.msra.mxu0 0.0
    %1484 = vmatprep.subr.mxu0 0.0
    %1485 = vmatpush1.msra.mxu0 0.0
    %1486 = vmatprep.subr.mxu0 0.0
    %1487 = vmatpush1.msra.mxu0 0.0
    %1488 = vmatprep.subr.mxu0 0.0
    %1489 = vmatpush1.msra.mxu0 0.0
    %1490 = vmatprep.subr.mxu0 0.0
    %1491 = vmatpush1.msra.mxu0 0.0
    %1492 = vmatprep.subr.mxu0 0.0
    %1493 = vmatpush1.msra.mxu0 0.0
    %1494 = vmatprep.subr.mxu0 0.0
    %1495 = vmatpush1.msra.mxu0 0.0
    %1496 = vmatprep.subr.mxu0 0.0
    %1497 = vmatpush1.msra.mxu0 0.0
    %1498 = vmatprep.subr.mxu0 0.0
    %1499 = vmatpush1.msra.mxu0 0.0
    %1500 = vmatprep.subr.mxu0 0.0
    %1501 = vmatpush1.msra.mxu0 0.0
    %1502 = vmatprep.subr.mxu0 0.0
    %1503 = vmatpush1.msra.mxu0 0.0
    %1504 = vmatprep.subr.mxu0 0.0
    %1505 = vmatpush1.msra.mxu0 0.0
    %1506 = vmatprep.subr.mxu0 0.0
    %1507 = vmatpush1.msra.mxu0 0.0
    %1508 = vmatprep.subr.mxu0 0.0
    %1509 = vmatpush1.msra.mxu0 0.0
    %1510 = vmatprep.subr.mxu0 0.0
    %1511 = vmatpush1.msra.mxu0 0.0
    %1512 = vmatprep.subr.mxu0 0.0
    %1513 = vmatpush1.msra.mxu0 0.0
    %1514 = vmatprep.subr.mxu0 0.0
    %1515 = vmatpush1.msra.mxu0 0.0
    %1516 = vmatprep.subr.mxu0 0.0
    %1517 = vmatpush1.msra.mxu0 0.0
    %1518 = vmatprep.subr.mxu0 0.0
    %1519 = vmatpush1.msra.mxu0 0.0
    %1520 = vmatprep.subr.mxu0 0.0
    %1521 = vmatpush1.msra.mxu0 0.0
    %1522 = vmatprep.subr.mxu0 0.0
    %1523 = vmatpush1.msra.mxu0 0.0
    %1524 = vmatprep.subr.mxu0 0.0
    %1525 = vmatpush1.msra.mxu0 0.0
    %1526 = vmatprep.subr.mxu0 0.0
    %1527 = vmatpush1.msra.mxu0 0.0
    %1528 = vmatprep.subr.mxu0 0.0
    %1529 = vmatpush1.msra.mxu0 0.0
    %1530 = vmatprep.subr.mxu0 0.0
    %1531 = vmatpush1.msra.mxu0 0.0
    %1532 = vmatprep.subr.mxu0 0.0
    %1533 = vmatpush1.msra.mxu0 0.0
    %1534 = vmatprep.subr.mxu0 0.0
    %1535 = vmatpush1.msra.mxu0 0.0
    %1536 = vmatprep.subr.mxu0 0.0
    %1537 = vmatpush1.msra.mxu0 0.0
    %1538 = vmatprep.mubr.f32.mxu0 0.0
    %1539 = vmatmul.mubr.f32.gmra.mrb[0].mxu0 %v1472
    %v1540 = vpop.f32.mrb[0].mxu0
    %v1541 = vadd.f32 0.0, %v1540
    %v1542 = vpop.f32.mrb[0].mxu0
    %1543 = vdwg.mxu0
    %v1544 = vadd.f32 %v1468, %v1541
    %v1545 = vxor.u32 %v1544, 2147483648
    %v1546 = vmul.f32 %v1545, 1.442695
    %v1547 = vpow.pop %v1546
    %v1548 = vadd.f32 %v1547, 1.0
    %v1549 = vrcp.pop %v1548
    %v1550 = vmul.f32 1.0, %v1549
    %v1551 = vtanh.pop %v1544
    %v1552 = vmul.f32 %v1550, %v1461
    %1554 = vrot.lane.b32.xlu0 %v1551, 64
    %v1555 = vpop.permute.xlu0 %1554
    %v1557 = vmul.f32 %v1550, %v1555
    %1559 = vrot.lane.b32.xlu0 %v1557, 32
    %v1560 = vpop.permute.xlu0 %1559
    %v1562 = vadd.f32 %v1552, %v1560
    %v1563 = vtanh.pop %v1562
    %1565 = vrot.lane.b32.xlu0 %v1563, 64
    %v1566 = vpop.permute.xlu0 %1565
    %v1568 = vmul.f32 %v1550, %v1566
    %v1569 = vld [vmem:[#allocation2 + $0xa] sm:$0x3]
    %1571 = vrot.lane.b32.xlu0 %v1568, 32
    %v1572 = vpop.permute.xlu0 %1571
    %v1573 = vsel %vm137, %v1572, 0
    %1575 = vmatprep.subr.mxu0 0.0
    %1576 = vmatpush1.msra.mxu0 %v973
    %1577 = vmatprep.subr.mxu0 0.0
    %1578 = vmatpush1.msra.mxu0 %v974
    %1579 = vmatprep.subr.mxu0 0.0
    %1580 = vmatpush1.msra.mxu0 %v975
    %1581 = vmatprep.subr.mxu0 0.0
    %1582 = vmatpush1.msra.mxu0 %v976
    %1583 = vmatprep.subr.mxu0 0.0
    %1584 = vmatpush1.msra.mxu0 0.0
    %1585 = vmatprep.subr.mxu0 0.0
    %1586 = vmatpush1.msra.mxu0 0.0
    %1587 = vmatprep.subr.mxu0 0.0
    %1588 = vmatpush1.msra.mxu0 0.0
    %1589 = vmatprep.subr.mxu0 0.0
    %1590 = vmatpush1.msra.mxu0 0.0
    %1591 = vmatprep.subr.mxu0 0.0
    %1592 = vmatpush1.msra.mxu0 0.0
    %1593 = vmatprep.subr.mxu0 0.0
    %1594 = vmatpush1.msra.mxu0 0.0
    %1595 = vmatprep.subr.mxu0 0.0
    %1596 = vmatpush1.msra.mxu0 0.0
    %1597 = vmatprep.subr.mxu0 0.0
    %1598 = vmatpush1.msra.mxu0 0.0
    %1599 = vmatprep.subr.mxu0 0.0
    %1600 = vmatpush1.msra.mxu0 0.0
    %1601 = vmatprep.subr.mxu0 0.0
    %1602 = vmatpush1.msra.mxu0 0.0
    %1603 = vmatprep.subr.mxu0 0.0
    %1604 = vmatpush1.msra.mxu0 0.0
    %1605 = vmatprep.subr.mxu0 0.0
    %1606 = vmatpush1.msra.mxu0 0.0
    %1607 = vmatprep.subr.mxu0 0.0
    %1608 = vmatpush1.msra.mxu0 0.0
    %1609 = vmatprep.subr.mxu0 0.0
    %1610 = vmatpush1.msra.mxu0 0.0
    %1611 = vmatprep.subr.mxu0 0.0
    %1612 = vmatpush1.msra.mxu0 0.0
    %1613 = vmatprep.subr.mxu0 0.0
    %1614 = vmatpush1.msra.mxu0 0.0
    %1615 = vmatprep.subr.mxu0 0.0
    %1616 = vmatpush1.msra.mxu0 0.0
    %1617 = vmatprep.subr.mxu0 0.0
    %1618 = vmatpush1.msra.mxu0 0.0
    %1619 = vmatprep.subr.mxu0 0.0
    %1620 = vmatpush1.msra.mxu0 0.0
    %1621 = vmatprep.subr.mxu0 0.0
    %1622 = vmatpush1.msra.mxu0 0.0
    %1623 = vmatprep.subr.mxu0 0.0
    %1624 = vmatpush1.msra.mxu0 0.0
    %1625 = vmatprep.subr.mxu0 0.0
    %1626 = vmatpush1.msra.mxu0 0.0
    %1627 = vmatprep.subr.mxu0 0.0
    %1628 = vmatpush1.msra.mxu0 0.0
    %1629 = vmatprep.subr.mxu0 0.0
    %1630 = vmatpush1.msra.mxu0 0.0
    %1631 = vmatprep.subr.mxu0 0.0
    %1632 = vmatpush1.msra.mxu0 0.0
    %1633 = vmatprep.subr.mxu0 0.0
    %1634 = vmatpush1.msra.mxu0 0.0
    %1635 = vmatprep.subr.mxu0 0.0
    %1636 = vmatpush1.msra.mxu0 0.0
    %1637 = vmatprep.subr.mxu0 0.0
    %1638 = vmatpush1.msra.mxu0 0.0
    %1639 = vmatprep.mubr.f32.mxu0 0.0
    %1640 = vmatmul.mubr.f32.gmra.mrb[0].mxu0 %v1573
    %v1641 = vpop.f32.mrb[0].mxu0
    %v1642 = vadd.f32 0.0, %v1641
    %v1643 = vpop.f32.mrb[0].mxu0
    %1644 = vdwg.mxu0
    %v1645 = vadd.f32 %v1569, %v1642
    %v1646 = vxor.u32 %v1645, 2147483648
    %v1647 = vmul.f32 %v1646, 1.442695
    %v1648 = vpow.pop %v1647
    %v1649 = vadd.f32 %v1648, 1.0
    %v1650 = vrcp.pop %v1649
    %v1651 = vmul.f32 1.0, %v1650
    %v1652 = vtanh.pop %v1645
    %v1653 = vmul.f32 %v1651, %v1562
    %1655 = vrot.lane.b32.xlu0 %v1652, 64
    %v1656 = vpop.permute.xlu0 %1655
    %v1658 = vmul.f32 %v1651, %v1656
    %1660 = vrot.lane.b32.xlu0 %v1658, 32
    %v1661 = vpop.permute.xlu0 %1660
    %v1663 = vadd.f32 %v1653, %v1661
    %v1664 = vtanh.pop %v1663
    %1666 = vrot.lane.b32.xlu0 %v1664, 64
    %v1667 = vpop.permute.xlu0 %1666
    %v1669 = vmul.f32 %v1651, %v1667
    %v1670 = vld [vmem:[#allocation2 + $0xc] sm:$0x3]
    %1672 = vrot.lane.b32.xlu0 %v1669, 32
    %v1673 = vpop.permute.xlu0 %1672
    %v1674 = vsel %vm137, %v1673, 0
    %1676 = vmatprep.subr.mxu0 0.0
    %1677 = vmatpush1.msra.mxu0 %v973
    %1678 = vmatprep.subr.mxu0 0.0
    %1679 = vmatpush1.msra.mxu0 %v974
    %1680 = vmatprep.subr.mxu0 0.0
    %1681 = vmatpush1.msra.mxu0 %v975
    %1682 = vmatprep.subr.mxu0 0.0
    %1683 = vmatpush1.msra.mxu0 %v976
    %1684 = vmatprep.subr.mxu0 0.0
    %1685 = vmatpush1.msra.mxu0 0.0
    %1686 = vmatprep.subr.mxu0 0.0
    %1687 = vmatpush1.msra.mxu0 0.0
    %1688 = vmatprep.subr.mxu0 0.0
    %1689 = vmatpush1.msra.mxu0 0.0
    %1690 = vmatprep.subr.mxu0 0.0
    %1691 = vmatpush1.msra.mxu0 0.0
    %1692 = vmatprep.subr.mxu0 0.0
    %1693 = vmatpush1.msra.mxu0 0.0
    %1694 = vmatprep.subr.mxu0 0.0
    %1695 = vmatpush1.msra.mxu0 0.0
    %1696 = vmatprep.subr.mxu0 0.0
    %1697 = vmatpush1.msra.mxu0 0.0
    %1698 = vmatprep.subr.mxu0 0.0
    %1699 = vmatpush1.msra.mxu0 0.0
    %1700 = vmatprep.subr.mxu0 0.0
    %1701 = vmatpush1.msra.mxu0 0.0
    %1702 = vmatprep.subr.mxu0 0.0
    %1703 = vmatpush1.msra.mxu0 0.0
    %1704 = vmatprep.subr.mxu0 0.0
    %1705 = vmatpush1.msra.mxu0 0.0
    %1706 = vmatprep.subr.mxu0 0.0
    %1707 = vmatpush1.msra.mxu0 0.0
    %1708 = vmatprep.subr.mxu0 0.0
    %1709 = vmatpush1.msra.mxu0 0.0
    %1710 = vmatprep.subr.mxu0 0.0
    %1711 = vmatpush1.msra.mxu0 0.0
    %1712 = vmatprep.subr.mxu0 0.0
    %1713 = vmatpush1.msra.mxu0 0.0
    %1714 = vmatprep.subr.mxu0 0.0
    %1715 = vmatpush1.msra.mxu0 0.0
    %1716 = vmatprep.subr.mxu0 0.0
    %1717 = vmatpush1.msra.mxu0 0.0
    %1718 = vmatprep.subr.mxu0 0.0
    %1719 = vmatpush1.msra.mxu0 0.0
    %1720 = vmatprep.subr.mxu0 0.0
    %1721 = vmatpush1.msra.mxu0 0.0
    %1722 = vmatprep.subr.mxu0 0.0
    %1723 = vmatpush1.msra.mxu0 0.0
    %1724 = vmatprep.subr.mxu0 0.0
    %1725 = vmatpush1.msra.mxu0 0.0
    %1726 = vmatprep.subr.mxu0 0.0
    %1727 = vmatpush1.msra.mxu0 0.0
    %1728 = vmatprep.subr.mxu0 0.0
    %1729 = vmatpush1.msra.mxu0 0.0
    %1730 = vmatprep.subr.mxu0 0.0
    %1731 = vmatpush1.msra.mxu0 0.0
    %1732 = vmatprep.subr.mxu0 0.0
    %1733 = vmatpush1.msra.mxu0 0.0
    %1734 = vmatprep.subr.mxu0 0.0
    %1735 = vmatpush1.msra.mxu0 0.0
    %1736 = vmatprep.subr.mxu0 0.0
    %1737 = vmatpush1.msra.mxu0 0.0
    %1738 = vmatprep.subr.mxu0 0.0
    %1739 = vmatpush1.msra.mxu0 0.0
    %1740 = vmatprep.mubr.f32.mxu0 0.0
    %1741 = vmatmul.mubr.f32.gmra.mrb[0].mxu0 %v1674
    %v1742 = vpop.f32.mrb[0].mxu0
    %v1743 = vadd.f32 0.0, %v1742
    %v1744 = vpop.f32.mrb[0].mxu0
    %1745 = vdwg.mxu0
    %v1746 = vadd.f32 %v1670, %v1743
    %v1747 = vxor.u32 %v1746, 2147483648
    %v1748 = vmul.f32 %v1747, 1.442695
    %v1749 = vpow.pop %v1748
    %v1750 = vadd.f32 %v1749, 1.0
    %v1751 = vrcp.pop %v1750
    %v1752 = vmul.f32 1.0, %v1751
    %v1753 = vtanh.pop %v1746
    %v1754 = vmul.f32 %v1752, %v1663
    %1756 = vrot.lane.b32.xlu0 %v1753, 64
    %v1757 = vpop.permute.xlu0 %1756
    %v1759 = vmul.f32 %v1752, %v1757
    %1761 = vrot.lane.b32.xlu0 %v1759, 32
    %v1762 = vpop.permute.xlu0 %1761
    %v1764 = vadd.f32 %v1754, %v1762
    %v1765 = vtanh.pop %v1764
    %1767 = vrot.lane.b32.xlu0 %v1765, 64
    %v1768 = vpop.permute.xlu0 %1767
    %v1770 = vmul.f32 %v1752, %v1768
    %v1771 = vld [vmem:[#allocation2 + $0xe] sm:$0x3]
    %1773 = vrot.lane.b32.xlu0 %v1770, 32
    %v1774 = vpop.permute.xlu0 %1773
    %v1775 = vsel %vm137, %v1774, 0
    %1777 = vmatprep.subr.mxu0 0.0
    %1778 = vmatpush1.msra.mxu0 %v973
    %1779 = vmatprep.subr.mxu0 0.0
    %1780 = vmatpush1.msra.mxu0 %v974
    %1781 = vmatprep.subr.mxu0 0.0
    %1782 = vmatpush1.msra.mxu0 %v975
    %1783 = vmatprep.subr.mxu0 0.0
    %1784 = vmatpush1.msra.mxu0 %v976
    %1785 = vmatprep.subr.mxu0 0.0
    %1786 = vmatpush1.msra.mxu0 0.0
    %1787 = vmatprep.subr.mxu0 0.0
    %1788 = vmatpush1.msra.mxu0 0.0
    %1789 = vmatprep.subr.mxu0 0.0
    %1790 = vmatpush1.msra.mxu0 0.0
    %1791 = vmatprep.subr.mxu0 0.0
    %1792 = vmatpush1.msra.mxu0 0.0
    %1793 = vmatprep.subr.mxu0 0.0
    %1794 = vmatpush1.msra.mxu0 0.0
    %1795 = vmatprep.subr.mxu0 0.0
    %1796 = vmatpush1.msra.mxu0 0.0
    %1797 = vmatprep.subr.mxu0 0.0
    %1798 = vmatpush1.msra.mxu0 0.0
    %1799 = vmatprep.subr.mxu0 0.0
    %1800 = vmatpush1.msra.mxu0 0.0
    %1801 = vmatprep.subr.mxu0 0.0
    %1802 = vmatpush1.msra.mxu0 0.0
    %1803 = vmatprep.subr.mxu0 0.0
    %1804 = vmatpush1.msra.mxu0 0.0
    %1805 = vmatprep.subr.mxu0 0.0
    %1806 = vmatpush1.msra.mxu0 0.0
    %1807 = vmatprep.subr.mxu0 0.0
    %1808 = vmatpush1.msra.mxu0 0.0
    %1809 = vmatprep.subr.mxu0 0.0
    %1810 = vmatpush1.msra.mxu0 0.0
    %1811 = vmatprep.subr.mxu0 0.0
    %1812 = vmatpush1.msra.mxu0 0.0
    %1813 = vmatprep.subr.mxu0 0.0
    %1814 = vmatpush1.msra.mxu0 0.0
    %1815 = vmatprep.subr.mxu0 0.0
    %1816 = vmatpush1.msra.mxu0 0.0
    %1817 = vmatprep.subr.mxu0 0.0
    %1818 = vmatpush1.msra.mxu0 0.0
    %1819 = vmatprep.subr.mxu0 0.0
    %1820 = vmatpush1.msra.mxu0 0.0
    %1821 = vmatprep.subr.mxu0 0.0
    %1822 = vmatpush1.msra.mxu0 0.0
    %1823 = vmatprep.subr.mxu0 0.0
    %1824 = vmatpush1.msra.mxu0 0.0
    %1825 = vmatprep.subr.mxu0 0.0
    %1826 = vmatpush1.msra.mxu0 0.0
    %1827 = vmatprep.subr.mxu0 0.0
    %1828 = vmatpush1.msra.mxu0 0.0
    %1829 = vmatprep.subr.mxu0 0.0
    %1830 = vmatpush1.msra.mxu0 0.0
    %1831 = vmatprep.subr.mxu0 0.0
    %1832 = vmatpush1.msra.mxu0 0.0
    %1833 = vmatprep.subr.mxu0 0.0
    %1834 = vmatpush1.msra.mxu0 0.0
    %1835 = vmatprep.subr.mxu0 0.0
    %1836 = vmatpush1.msra.mxu0 0.0
    %1837 = vmatprep.subr.mxu0 0.0
    %1838 = vmatpush1.msra.mxu0 0.0
    %1839 = vmatprep.subr.mxu0 0.0
    %1840 = vmatpush1.msra.mxu0 0.0
    %1841 = vmatprep.mubr.f32.mxu0 0.0
    %1842 = vmatmul.mubr.f32.gmra.mrb[0].mxu0 %v1775
    %v1843 = vpop.f32.mrb[0].mxu0
    %v1844 = vadd.f32 0.0, %v1843
    %v1845 = vpop.f32.mrb[0].mxu0
    %1846 = vdwg.mxu0
    %v1847 = vadd.f32 %v1771, %v1844
    %v1848 = vxor.u32 %v1847, 2147483648
    %v1849 = vmul.f32 %v1848, 1.442695
    %v1850 = vpow.pop %v1849
    %v1851 = vadd.f32 %v1850, 1.0
    %v1852 = vrcp.pop %v1851
    %v1853 = vmul.f32 1.0, %v1852
    %v1854 = vtanh.pop %v1847
    %v1855 = vmul.f32 %v1853, %v1764
    %1857 = vrot.lane.b32.xlu0 %v1854, 64
    %v1858 = vpop.permute.xlu0 %1857
    %v1860 = vmul.f32 %v1853, %v1858
    %1862 = vrot.lane.b32.xlu0 %v1860, 32
    %v1863 = vpop.permute.xlu0 %1862
    %v1865 = vadd.f32 %v1855, %v1863
    %v1866 = vtanh.pop %v1865
    %1868 = vrot.lane.b32.xlu0 %v1866, 64
    %v1869 = vpop.permute.xlu0 %1868
    %v1871 = vmul.f32 %v1853, %v1869
    %1873 = vrot.lane.b32.xlu0 %v1871, 32
    %v1874 = vpop.permute.xlu0 %1873
    %s1876 = scalar_lea.vmem [#allocation6], 2
    %1877 = vst.msk [vmem:[%s1876] sm:$0x3] %vm240, %v1874
    %1879 = vrot.lane.b32.xlu0 %v1865, 96
    %v1880 = vpop.permute.xlu0 %1879
    %s1882 = scalar_lea.vmem [#allocation8], 2
    %1883 = vst.msk [vmem:[%s1882] sm:$0x3] %vm240, %v1880
    %v1884 = vld [vmem:[%s7] sm:$0xff]
    %v1885 = vld [vmem:[%s7 + $0x8] sm:$0xff]
    %v1886 = vld [vmem:[%s7 + $0x10] sm:$0xff]
    %v1887 = vld [vmem:[%s7 + $0x18] sm:$0xff]
    %v1888 = vld [vmem:[%s8] sm:$0x1]
    %v1890 = vlaneseq
    %v1891 = vshrl.u32 %v1890, 7
    %v1892 = vsub.s32 0, %v1891
    %v1893 = vrot.slane %v1888, %v1892
    %v1895 = vsel %vm137, %v1874, 0
    %1897 = vmatprep.subr.mxu0 0.0
    %1898 = vmatpush1.msra.mxu0 %v1884
    %1899 = vmatprep.subr.mxu0 0.0
    %1900 = vmatpush1.msra.mxu0 %v1885
    %1901 = vmatprep.subr.mxu0 0.0
    %1902 = vmatpush1.msra.mxu0 %v1886
    %1903 = vmatprep.subr.mxu0 0.0
    %1904 = vmatpush1.msra.mxu0 %v1887
    %1905 = vmatprep.subr.mxu0 0.0
    %1906 = vmatpush1.msra.mxu0 0.0
    %1907 = vmatprep.subr.mxu0 0.0
    %1908 = vmatpush1.msra.mxu0 0.0
    %1909 = vmatprep.subr.mxu0 0.0
    %1910 = vmatpush1.msra.mxu0 0.0
    %1911 = vmatprep.subr.mxu0 0.0
    %1912 = vmatpush1.msra.mxu0 0.0
    %1913 = vmatprep.subr.mxu0 0.0
    %1914 = vmatpush1.msra.mxu0 0.0
    %1915 = vmatprep.subr.mxu0 0.0
    %1916 = vmatpush1.msra.mxu0 0.0
    %1917 = vmatprep.subr.mxu0 0.0
    %1918 = vmatpush1.msra.mxu0 0.0
    %1919 = vmatprep.subr.mxu0 0.0
    %1920 = vmatpush1.msra.mxu0 0.0
    %1921 = vmatprep.subr.mxu0 0.0
    %1922 = vmatpush1.msra.mxu0 0.0
    %1923 = vmatprep.subr.mxu0 0.0
    %1924 = vmatpush1.msra.mxu0 0.0
    %1925 = vmatprep.subr.mxu0 0.0
    %1926 = vmatpush1.msra.mxu0 0.0
    %1927 = vmatprep.subr.mxu0 0.0
    %1928 = vmatpush1.msra.mxu0 0.0
    %1929 = vmatprep.subr.mxu0 0.0
    %1930 = vmatpush1.msra.mxu0 0.0
    %1931 = vmatprep.subr.mxu0 0.0
    %1932 = vmatpush1.msra.mxu0 0.0
    %1933 = vmatprep.subr.mxu0 0.0
    %1934 = vmatpush1.msra.mxu0 0.0
    %1935 = vmatprep.subr.mxu0 0.0
    %1936 = vmatpush1.msra.mxu0 0.0
    %1937 = vmatprep.subr.mxu0 0.0
    %1938 = vmatpush1.msra.mxu0 0.0
    %1939 = vmatprep.subr.mxu0 0.0
    %1940 = vmatpush1.msra.mxu0 0.0
    %1941 = vmatprep.subr.mxu0 0.0
    %1942 = vmatpush1.msra.mxu0 0.0
    %1943 = vmatprep.subr.mxu0 0.0
    %1944 = vmatpush1.msra.mxu0 0.0
    %1945 = vmatprep.subr.mxu0 0.0
    %1946 = vmatpush1.msra.mxu0 0.0
    %1947 = vmatprep.subr.mxu0 0.0
    %1948 = vmatpush1.msra.mxu0 0.0
    %1949 = vmatprep.subr.mxu0 0.0
    %1950 = vmatpush1.msra.mxu0 0.0
    %1951 = vmatprep.subr.mxu0 0.0
    %1952 = vmatpush1.msra.mxu0 0.0
    %1953 = vmatprep.subr.mxu0 0.0
    %1954 = vmatpush1.msra.mxu0 0.0
    %1955 = vmatprep.subr.mxu0 0.0
    %1956 = vmatpush1.msra.mxu0 0.0
    %1957 = vmatprep.subr.mxu0 0.0
    %1958 = vmatpush1.msra.mxu0 0.0
    %1959 = vmatprep.subr.mxu0 0.0
    %1960 = vmatpush1.msra.mxu0 0.0
    %1961 = vmatprep.mubr.f32.mxu0 0.0
    %1962 = vmatmul.mubr.f32.gmra.mrb[0].mxu0 %v1895
    %v1963 = vpop.f32.mrb[0].mxu0
    %v1964 = vadd.f32 %v1893, %v1963
    %v1965 = vpop.f32.mrb[0].mxu0
    %1966 = vdwg.mxu0
    %1967 = vst [vmem:[#allocation4] sm:$0x3] %v1964
    // Predicated region
    $region38: #{_lambda_.1} parent=1 // pred_check
      _
    $region39: #{_lambda_.1} parent=1 // pred_check_branch
      %1969 = sbr.rel (0) target = $region41
    $region40: #{_lambda_.1} parent=1 // pred_region
      %s1971 = ssub.s32 32, 32
      %1972 = vsyncadd [#allocation5], %s1971
      %s1974 = sshll.u32 [#allocation4], 4
      %s1975 = int_to_ptr.vmem [resolvable:$true] %s1974
      %1977 = dma.vmem_to_hbm [thread:$0]  %s1975, 32, %s9, [#allocation5]
    $region41: #{_lambda_.1} parent=1 // pred_fallthru
      _
    // Predicated region
    $region42: #{_lambda_.1} parent=1 // pred_check
      _
    $region43: #{_lambda_.1} parent=1 // pred_check_branch
      %1979 = sbr.rel (0) target = $region45
    $region44: #{_lambda_.1} parent=1 // pred_region
      %s1981 = ssub.s32 64, 64
      %1982 = vsyncadd [#allocation7], %s1981
      %s1983 = sshll.u32 [#allocation6], 4
      %s1984 = int_to_ptr.vmem [resolvable:$true] %s1983
      %1989 = dma.vmem_to_hbm [thread:$0]  %s1984, 64, %s10, [#allocation7], 32, 32, 2
    $region45: #{_lambda_.1} parent=1 // pred_fallthru
      _
    // Predicated region
    $region46: #{_lambda_.1} parent=1 // pred_check
      _
    $region47: #{_lambda_.1} parent=1 // pred_check_branch
      %1991 = sbr.rel (0) target = $region49
    $region48: #{_lambda_.1} parent=1 // pred_region
      %s1993 = ssub.s32 64, 64
      %1994 = vsyncadd [#allocation7], %s1993
      %s1995 = sshll.u32 [#allocation8], 4
      %s1996 = int_to_ptr.vmem [resolvable:$true] %s1995
      %2001 = dma.vmem_to_hbm [thread:$0]  %s1996, 64, %s11, [#allocation7], 32, 32, 2
    $region49: #{_lambda_.1} parent=1 // pred_fallthru
      _
    // Predicated region
    $region50: #{_lambda_.1} parent=1 // pred_check
      _
    $region51: #{_lambda_.1} parent=1 // pred_check_branch
      %2003 = sbr.rel (0) target = $region53
    $region52: #{_lambda_.1} parent=1 // pred_region
      %2004 = dma.done [#allocation5], 32
    $region53: #{_lambda_.1} parent=1 // pred_fallthru
      _
    // Predicated region
    $region54: #{_lambda_.1} parent=1 // pred_check
      _
    $region55: #{_lambda_.1} parent=1 // pred_check_branch
      %2006 = sbr.rel (0) target = $region57
    $region56: #{_lambda_.1} parent=1 // pred_region
      %2007 = dma.done [#allocation7], 64
    $region57: #{_lambda_.1} parent=1 // pred_fallthru
      _
    // Predicated region
    $region58: #{_lambda_.1} parent=1 // pred_check
      _
    $region59: #{_lambda_.1} parent=1 // pred_check_branch
      %2009 = sbr.rel (0) target = $region61
    $region60: #{_lambda_.1} parent=1 // pred_region
      %2010 = dma.done [#allocation7], 64
    $region61: #{_lambda_.1} parent=1 // pred_fallthru
      _
    %2011 = vsyncpa [#allocation5], 1
    %2012 = vsyncpa [#allocation7], 1

</llo_original>
